<compile_context>
chip_gen: v5e
topology: v5e:2x2
jax: 0.10.0
libtpu: 0.0.40
codegen_flags: <defaults>
</compile_context>

<pallas_src>
import math
from functools import partial

import jax
import jax.numpy as jnp
from jax import lax
from jax.experimental import pallas as pl
from jax.experimental.pallas import tpu as pltpu


_VMEM_LIMIT = 32 * 1024 * 1024   # tiles here are small; safe on v5e/v6e/v7x (64 MiB)
_MASK_VALUE = -1e30              # finite "-inf" for the causal mask


# ---------------------------------------------------------------------------
# Tiled matmul + bias kernels (qkv projection and o_proj)
# ---------------------------------------------------------------------------
def _matmul_bias_acc_kernel(x_ref, w_ref, b_ref, o_ref, acc_ref):
    @pl.when(pl.program_id(2) == 0)
    def _init():
        acc_ref[...] = jnp.zeros_like(acc_ref)

    acc_ref[...] += jnp.dot(x_ref[...], w_ref[...],
                            preferred_element_type=jnp.float32)

    @pl.when(pl.program_id(2) == pl.num_programs(2) - 1)
    def _finalize():
        o_ref[...] = (acc_ref[...] + b_ref[...]).astype(o_ref.dtype)


def _matmul_bias_single_kernel(x_ref, w_ref, b_ref, o_ref):
    # Single K step: no accumulator scratch round-trip, write output directly.
    o_ref[...] = (jnp.dot(x_ref[...], w_ref[...],
                          preferred_element_type=jnp.float32)
                  + b_ref[...]).astype(o_ref.dtype)


def _matmul_bias(x, w, b, *, out_dtype, block_m=512, block_n=256, block_k=256):
    M, K = x.shape
    Kw, N = w.shape
    assert K == Kw
    bm, bn, bk = min(block_m, M), min(block_n, N), min(block_k, K)
    assert M % bm == 0 and N % bn == 0 and K % bk == 0
    gm, gn, gk = M // bm, N // bn, K // bk
    b2 = b.reshape(1, N).astype(jnp.float32)

    if gk == 1:
        kernel = _matmul_bias_single_kernel
        scratch = []
    else:
        kernel = _matmul_bias_acc_kernel
        scratch = [pltpu.VMEM((bm, bn), jnp.float32)]

    return pl.pallas_call(
        kernel,
        out_shape=jax.ShapeDtypeStruct((M, N), out_dtype),
        grid_spec=pltpu.PrefetchScalarGridSpec(
            num_scalar_prefetch=0,
            grid=(gm, gn, gk),
            in_specs=[
                pl.BlockSpec((bm, bk), lambda i, j, k: (i, k)),
                pl.BlockSpec((bk, bn), lambda i, j, k: (k, j)),
                pl.BlockSpec((1, bn), lambda i, j, k: (0, j)),
            ],
            out_specs=pl.BlockSpec((bm, bn), lambda i, j, k: (i, j)),
            scratch_shapes=scratch,
        ),
        compiler_params=pltpu.CompilerParams(
            dimension_semantics=("parallel", "parallel", "arbitrary"),
            vmem_limit_bytes=_VMEM_LIMIT),
    )(x, w, b2)


# ---------------------------------------------------------------------------
# Head-fused causal flash attention
#   grid = (B, n_q_tiles, n_kv_tiles); each step processes all heads.
#   Inputs are column blocks of the (B, S, 3*D) qkv buffer (Q|K|V).
#   Output is written directly in (B, S, D) layout (lane-dense D=256 blocks).
# ---------------------------------------------------------------------------
def _flash_attn_kernel(q_ref, k_ref, v_ref, o_ref, m_scr, l_scr, acc_scr,
                       *, n_heads, head_dim):
    qi = pl.program_id(1)
    ki = pl.program_id(2)

    @pl.when(ki == 0)
    def _init():
        m_scr[...] = jnp.full_like(m_scr, -jnp.inf)
        l_scr[...] = jnp.zeros_like(l_scr)
        acc_scr[...] = jnp.zeros_like(acc_scr)

    def _update(apply_mask):
        bq = q_ref.shape[0]
        bk = k_ref.shape[0]
        if apply_mask:
            # Diagonal tile only (bq == bk and qi == ki): relative positions
            # within the tile suffice for the causal comparison.
            row = lax.broadcasted_iota(jnp.int32, (bq, bk), 0)
            col = lax.broadcasted_iota(jnp.int32, (bq, bk), 1)
            mask = col <= row
        for h in range(n_heads):
            cols = slice(h * head_dim, (h + 1) * head_dim)
            q_h = q_ref[:, cols]                       # (bq, hd) bf16, scale folded in
            k_h = k_ref[:, cols]                       # (bk, hd) bf16
            v_h = v_ref[:, cols]                       # (bk, hd) bf16

            s = lax.dot_general(q_h, k_h, (((1,), (1,)), ((), ())),
                                preferred_element_type=jnp.float32)  # (bq, bk)
            if apply_mask:
                s = jnp.where(mask, s, _MASK_VALUE)

            m_prev = m_scr[:, h:h + 1]
            m_new = jnp.maximum(m_prev, jnp.max(s, axis=-1, keepdims=True))
            alpha = jnp.exp(m_prev - m_new)
            p = jnp.exp(s - m_new)
            l_scr[:, h:h + 1] = (alpha * l_scr[:, h:h + 1]
                                 + jnp.sum(p, axis=-1, keepdims=True))
            acc_scr[:, cols] = alpha * acc_scr[:, cols] + jnp.dot(
                p.astype(v_h.dtype), v_h, preferred_element_type=jnp.float32)
            m_scr[:, h:h + 1] = m_new

    # Causal handling: diagonal tiles get the mask, strictly-below tiles are
    # fully unmasked, strictly-above tiles do nothing (and their K/V DMAs are
    # elided via the clamped index_map in the wrapper).
    @pl.when(ki == qi)
    def _diag():
        _update(apply_mask=True)

    @pl.when(ki < qi)
    def _off_diag():
        _update(apply_mask=False)

    @pl.when(ki == pl.num_programs(2) - 1)
    def _finalize():
        for h in range(n_heads):
            cols = slice(h * head_dim, (h + 1) * head_dim)
            inv_l = pl.reciprocal(l_scr[:, h:h + 1], approx=True)  # EUP slot
            o_ref[:, cols] = (acc_scr[:, cols] * inv_l).astype(o_ref.dtype)


def _flash_attention(qkv, *, n_heads, seq_len, d_model, out_dtype,
                     block_q=128, block_k=128):
    B = qkv.shape[0]
    head_dim = d_model // n_heads
    bq, bk = min(block_q, seq_len), min(block_k, seq_len)
    assert bq == bk, "causal tile skip assumes square q/kv tiles"
    assert seq_len % bq == 0
    n_q, n_kv = seq_len // bq, seq_len // bk

    kernel = partial(_flash_attn_kernel, n_heads=n_heads, head_dim=head_dim)

    return pl.pallas_call(
        kernel,
        out_shape=jax.ShapeDtypeStruct((B, seq_len, d_model), out_dtype),
        grid_spec=pltpu.PrefetchScalarGridSpec(
            num_scalar_prefetch=0,
            grid=(B, n_q, n_kv),
            in_specs=[
                # Q columns (block 0 along the 3*D axis), rows of the q tile.
                pl.BlockSpec((None, bq, d_model), lambda b, i, j: (b, i, 0)),
                # K columns (block 1), kv-tile rows; clamp j<=i so skipped
                # upper-triangle tiles reuse the previous block (DMA elided).
                pl.BlockSpec((None, bk, d_model),
                             lambda b, i, j: (b, jnp.minimum(j, i), 1)),
                # V columns (block 2), same clamped rows.
                pl.BlockSpec((None, bk, d_model),
                             lambda b, i, j: (b, jnp.minimum(j, i), 2)),
            ],
            out_specs=pl.BlockSpec((None, bq, d_model),
                                   lambda b, i, j: (b, i, 0)),
            scratch_shapes=[
                pltpu.VMEM((bq, n_heads), jnp.float32),   # running max per head
                pltpu.VMEM((bq, n_heads), jnp.float32),   # running denom per head
                pltpu.VMEM((bq, d_model), jnp.float32),   # output accumulator
            ],
        ),
        compiler_params=pltpu.CompilerParams(
            dimension_semantics=("parallel", "parallel", "arbitrary"),
            vmem_limit_bytes=_VMEM_LIMIT),
    )(qkv, qkv, qkv)


# ---------------------------------------------------------------------------
# Full SelfAttention forward
# ---------------------------------------------------------------------------
def self_attention(x, wqkv, bqkv, wo, bo, *, n_heads, block_q=128, block_k=128):
    """x: (B, S, D) f32. wqkv: (D, 3D) pre-transposed so y = x @ wqkv + bqkv,
    bqkv: (3D,), wo: (D, D) pre-transposed, bo: (D,)."""
    B, S, D = x.shape
    assert D % n_heads == 0
    hd = D // n_heads

    # Fold 1/sqrt(head_dim) into the q slice of the qkv projection weights.
    scale = 1.0 / math.sqrt(hd)
    wqkv = wqkv.at[:, :D].multiply(scale)
    bqkv = bqkv.at[:D].multiply(scale)

    # bf16 MXU operands, f32 accumulation inside the kernels.
    x_bf = x.astype(jnp.bfloat16).reshape(B * S, D)
    wqkv_bf = wqkv.astype(jnp.bfloat16)
    wo_bf = wo.astype(jnp.bfloat16)

    # 1) qkv projection -> (B*S, 3D); columns are [Q | K | V], heads contiguous.
    qkv = _matmul_bias(x_bf, wqkv_bf, bqkv, out_dtype=jnp.bfloat16)
    qkv = qkv.reshape(B, S, 3 * D)              # contiguous reshape, no transpose

    # 2) head-fused causal flash attention, output directly in (B, S, D) layout.
    attn = _flash_attention(qkv, n_heads=n_heads, seq_len=S, d_model=D,
                            out_dtype=jnp.bfloat16,
                            block_q=block_q, block_k=block_k)

    # 3) output projection (lane-dense 256-wide blocks), back to x dtype.
    out = _matmul_bias(attn.reshape(B * S, D), wo_bf, bo, out_dtype=x.dtype)
    # TODO(synk): nn.Dropout on attention weights omitted (inference/eval semantics).
    return out.reshape(B, S, D)


def self_attention_ref(x, wqkv, bqkv, wo, bo, *, n_heads):
    """Pure-JAX f32 reference mirroring the PyTorch forward (eval mode)."""
    B, seq, d_model = x.shape
    head_dim = d_model // n_heads
    qkv = x @ wqkv + bqkv
    q, k, v = jnp.split(qkv, 3, axis=-1)
    q = q.reshape(B, seq, n_heads, head_dim).transpose(0, 2, 1, 3)
    k = k.reshape(B, seq, n_heads, head_dim).transpose(0, 2, 1, 3)
    v = v.reshape(B, seq, n_heads, head_dim).transpose(0, 2, 1, 3)
    scores = q @ jnp.swapaxes(k, -2, -1) / math.sqrt(head_dim)
    mask = jnp.tril(jnp.ones((seq, seq)))[None, None]
    scores = jnp.where(mask == 0, -jnp.inf, scores)
    weights = jax.nn.softmax(scores, axis=-1)
    out = weights @ v
    out = out.transpose(0, 2, 1, 3).reshape(B, seq, d_model)
    return out @ wo + bo


if __name__ == "__main__":
    # Config-consistent small shapes: d_model=256, n_heads=8 (defaults), Seq=256, B=2.
    B, SEQ, D_MODEL, N_HEADS = 2, 256, 256, 8

    key = jax.random.PRNGKey(0)
    kx, kw1, kb1, kw2, kb2 = jax.random.split(key, 5)

    x = jax.random.normal(kx, (B, SEQ, D_MODEL), dtype=jnp.float32)

    # nn.Linear(d_model, 3*d_model): weight (3D, D), bias (3D,); pre-transpose
    # so the kernels compute x @ W^T directly.
    scale1 = 1.0 / math.sqrt(D_MODEL)
    wqkv = jax.random.uniform(kw1, (3 * D_MODEL, D_MODEL),
                              minval=-scale1, maxval=scale1).T
    bqkv = jax.random.uniform(kb1, (3 * D_MODEL,), minval=-scale1, maxval=scale1)

    wo = jax.random.uniform(kw2, (D_MODEL, D_MODEL),
                            minval=-scale1, maxval=scale1).T
    bo = jax.random.uniform(kb2, (D_MODEL,), minval=-scale1, maxval=scale1)

    ref = self_attention_ref(x, wqkv, bqkv, wo, bo, n_heads=N_HEADS)

    # Default 128-wide tiles: exercises multi-kv-tile online softmax,
    # off-diagonal unmasked tiles and the clamped (DMA-elided) causal skip.
    out = self_attention(x, wqkv, bqkv, wo, bo, n_heads=N_HEADS)
    out = jax.block_until_ready(out)
    assert out.shape == (B, SEQ, D_MODEL)
    err = jnp.max(jnp.abs(out - ref))
    assert jnp.allclose(out, ref, atol=5e-2, rtol=5e-2), \
        f"mismatch vs reference (max abs err {err})"

    # Larger 256-wide tiles (single kv tile per q tile at this Seq): checks the
    # diagonal-only path with fewer, bigger grid steps.
    out_big = self_attention(x, wqkv, bqkv, wo, bo, n_heads=N_HEADS,
                             block_q=256, block_k=256)
    out_big = jax.block_until_ready(out_big)
    err2 = jnp.max(jnp.abs(out_big - ref))
    assert jnp.allclose(out_big, ref, atol=5e-2, rtol=5e-2), \
        f"mismatch vs reference at 256 tiles (max abs err {err2})"

    print("KERNEL_OK")
</pallas_src>

<mosaic_0001>
module attributes {stable_mosaic.version = 11 : i64} {
  func.func @_matmul_bias_single_kernel(%arg0: i32, %arg1: i32, %arg2: i32, %arg3: memref<512x256xbf16, #tpu.memory_space<vmem>>, %arg4: memref<256x256xbf16, #tpu.memory_space<vmem>>, %arg5: memref<1x256xf32, #tpu.memory_space<vmem>>, %arg6: memref<512x256xbf16, #tpu.memory_space<vmem>>) attributes {dimension_semantics = [#tpu.dimension_semantics<parallel>, #tpu.dimension_semantics<parallel>, #tpu.dimension_semantics<arbitrary>], iteration_bounds = array<i64: 1, 3, 1>, scalar_prefetch = 0 : i64, scratch_operands = 0 : i64, tpu.core_type = #tpu.core_type<tc>, window_params = [{transform_indices = @transform_0, window_bounds = array<i64: 512, 256>}, {transform_indices = @transform_1, window_bounds = array<i64: 256, 256>}, {transform_indices = @transform_2, window_bounds = array<i64: 1, 256>}, {transform_indices = @transform_3, window_bounds = array<i64: 512, 256>}]} {
    %c0 = arith.constant 0 : index
    %c0_0 = arith.constant 0 : index
    %0 = vector.load %arg3[%c0, %c0_0] : memref<512x256xbf16, #tpu.memory_space<vmem>>, vector<512x256xbf16>
    %c0_1 = arith.constant 0 : index
    %c0_2 = arith.constant 0 : index
    %1 = vector.load %arg4[%c0_1, %c0_2] : memref<256x256xbf16, #tpu.memory_space<vmem>>, vector<256x256xbf16>
    %cst = arith.constant dense<0.000000e+00> : vector<512x256xf32>
    %2 = tpu.matmul %0, %1, %cst {dimension_numbers = #tpu.dot_dimension_numbers<[1], [0], [0], [1], [0, 0, 1, 1], [], []>} : vector<512x256xbf16>, vector<256x256xbf16>, vector<512x256xf32> -> vector<512x256xf32>
    %c0_3 = arith.constant 0 : index
    %c0_4 = arith.constant 0 : index
    %3 = vector.load %arg5[%c0_3, %c0_4] : memref<1x256xf32, #tpu.memory_space<vmem>>, vector<1x256xf32>
    %4 = vector.broadcast %3 : vector<1x256xf32> to vector<512x256xf32>
    %5 = arith.addf %2, %4 : vector<512x256xf32>
    %6 = arith.truncf %5 : vector<512x256xf32> to vector<512x256xbf16>
    %c0_5 = arith.constant 0 : index
    %c0_6 = arith.constant 0 : index
    %7 = vector.load %arg6[%c0_5, %c0_6] : memref<512x256xbf16, #tpu.memory_space<vmem>>, vector<512x256xbf16>
    tpu.vector_store %arg6[%c0_5, %c0_6], %6 {strides = array<i32>} : memref<512x256xbf16, #tpu.memory_space<vmem>>, vector<512x256xbf16>,
    return
  }
  func.func @transform_0(%arg0: i32, %arg1: i32, %arg2: i32) -> (i32, i32) {
    %c0_i32 = arith.constant 0 : i32
    return %arg0, %arg2 : i32, i32
  }
  func.func @transform_1(%arg0: i32, %arg1: i32, %arg2: i32) -> (i32, i32) {
    %c0_i32 = arith.constant 0 : i32
    return %arg2, %arg1 : i32, i32
  }
  func.func @transform_2(%arg0: i32, %arg1: i32, %arg2: i32) -> (i32, i32) {
    %c0_i32 = arith.constant 0 : i32
    %c0_i32_0 = arith.constant 0 : i32
    return %c0_i32, %arg1 : i32, i32
  }
  func.func @transform_3(%arg0: i32, %arg1: i32, %arg2: i32) -> (i32, i32) {
    %c0_i32 = arith.constant 0 : i32
    return %arg0, %arg1 : i32, i32
  }
}

</mosaic_0001>

<llo_original>
// kernel: tpu_custom_call.1
$region0: #{tpu_custom_call.1}
  #allocation0 [shape = 'u32[]', space=smem, size = 0x4, offset = 0x4, fixed_abs, tag = 'smem constant byte address 0x4 - core index']
  #allocation1 [shape = 'u32[72,128]{1,0:T(1,128)}', space=vmem, size = 0x9000, scoped, tag = 'internal scratch']
  %s0 = inlined_call_operand.hbm [shape: bf16[512,256], index: 0, kind: input, shape index: {}]
  %s1 = inlined_call_operand.hbm [shape: bf16[256,768], index: 1, kind: input, shape index: {}]
  %s2 = inlined_call_operand.hbm [shape: f32[1,768], index: 2, kind: input, shape index: {}]
  %s3 = inlined_call_operand.hbm [shape: bf16[512,768], index: 3, kind: output, shape index: {}]
  %s4 = sld [smem:[#allocation0]]
  $region57: #{tpu_custom_call.1} parent=0
    _
  %s6 = ssub.s32 1, %s4
  %s7 = scalar_select 0, %s6, %s4
  $region1: #{tpu_custom_call.1} parent=0
    #allocation2 [shape = 'u8[262144]{0}', space=vmem, size = 0x40000, scoped, tag = 'input window, operand 0, single buffered']
    #allocation3 [shape = 's32[2]{0}', space=sflag, size = 0x8, scoped, tag = 'scoped memory for tpu_custom_call.1']
    #allocation4 [shape = 's32[2]{0}', space=sflag, size = 0x8, scoped, tag = 'scoped memory for tpu_custom_call.1']
    #allocation5 [shape = 'u8[262144]{0}', space=vmem, size = 0x40000, scoped, tag = 'input window, operand 1']
    #allocation6 [shape = 's32[2]{0}', space=sflag, size = 0x8, scoped, tag = 'scoped memory for tpu_custom_call.1']
    #allocation7 [shape = 'u8[2048]{0}', space=vmem, size = 0x800, scoped, tag = 'input window, operand 2']
    #allocation8 [shape = 'u8[524288]{0}', space=vmem, size = 0x80000, scoped, tag = 'output window, operand 0']
    %8 = vsyncpa [#allocation3], 0
    %9 = vsyncpa [#allocation6], 0
    %s10 = scalar_lea.sflag [#allocation6], 1
    %11 = vsyncpa %s10, 0
    %12 = vsyncpa [#allocation4], 0
    %s13 = scalar_lea.sflag [#allocation4], 1
    %14 = vsyncpa %s13, 0
    loop: start=0, step=1, limit=5
    $region2: #{tpu_custom_call.1} parent=1 // loop_pre_header
      _
    $region3: #{tpu_custom_call.1} parent=1 // loop_header
      %s16 = sphi 0, %s20
      %p17 = scmp.ge.s32.totalorder %s16, 5
      %s23 = sphi 0, %s42
      %s24 = sphi 0, %s38
      %s25 = sphi 0, %s34
      %s26 = sphi 0, %s23
      %s27 = sphi 0, %s24
      %s28 = sphi 0, %s25
      %s29 = sphi 0, %s26
      %s30 = sphi 0, %s27
      %s31 = sphi 0, %s28
      %s47 = sphi 0, %s49
      %s50 = sphi 0, %s47
      %s51 = sphi 0, %s50
      %s67 = sphi 0, %s51
      %s75 = sphi 0, %s77
      %s78 = sphi 0, %s75
      %s79 = sphi 0, %s78
      %s95 = sphi 0, %s79
      %s101 = sphi 0, %s103
      %s104 = sphi 0, %s101
      %s105 = sphi 0, %s104
      %s121 = sphi 0, %s105
      %s129 = sphi 0, %s131
      %s132 = sphi 0, %s129
      %s133 = sphi 0, %s132
      %s149 = sphi 0, %s133
    $region4: #{tpu_custom_call.1} parent=1 // loop_header_branch
      %19 = sbr.rel (%p17) target = $region8
    $region5: #{tpu_custom_call.1} parent=1 // loop_body
      %s21 = ssub.s32 %s16, 1
      %s22 = ssub.s32 %s16, 2
      %s32 = sadd.s32 1, %s25
      %p33 = scmp.ge.s32.totalorder %s32, 1
      %s34 = scalar_select %p33, 0, %s32
      %s35 = sadd.s32 1, %s24
      %s36 = scalar_select %p33, %s35, %s24
      %p37 = scmp.ge.s32.totalorder %s36, 3
      %s38 = scalar_select %p37, 0, %s36
      %s39 = sadd.s32 1, %s23
      %s40 = scalar_select %p37, %s39, %s23
      %p41 = scmp.ge.s32.totalorder %s40, 1
      %s42 = scalar_select %p41, 0, %s40
      %s43 = ssub.s32 %s23, %s42
      %s44 = ssub.s32 %s25, %s34
      %s45 = sor.u32 %s43, %s44
      %p46 = scmp.eq.s32.totalorder %s45, 0
      %s48 = sadd.s32 %s47, 1
      %s49 = scalar_select %p46, %s47, %s48
      %p52 = pneg %p46
      %p53 = scmp.eq.s32.totalorder %s16, 2
      %p54 = por %p52, %p53
      %p55 = scmp.ne.s32.totalorder %s47, %s50
      %p56 = scmp.eq.s32.totalorder %s16, 0
      %p57 = por %p55, %p56
      %p58 = scmp.ne.s32.totalorder %s47, %s50
      %p59 = scmp.eq.s32.totalorder %s21, 2
      %p60 = por %p58, %p59
      %p61 = scmp.ne.s32.totalorder %s50, %s51
      %p62 = scmp.eq.s32.totalorder %s21, 0
      %p63 = por %p61, %p62
      %p64 = scmp.ne.s32.totalorder %s50, %s51
      %p65 = scmp.eq.s32.totalorder %s22, 2
      %p66 = por %p64, %p65
      %p68 = scmp.ne.s32.totalorder %s51, %s67
      %p69 = scmp.eq.s32.totalorder %s22, 0
      %p70 = por %p68, %p69
      %s71 = ssub.s32 %s25, %s34
      %s72 = ssub.s32 %s24, %s38
      %s73 = sor.u32 %s71, %s72
      %p74 = scmp.eq.s32.totalorder %s73, 0
      %s76 = sadd.s32 %s75, 1
      %s77 = scalar_select %p74, %s75, %s76
      %p80 = pneg %p74
      %p81 = scmp.eq.s32.totalorder %s16, 2
      %p82 = por %p80, %p81
      %p83 = scmp.ne.s32.totalorder %s75, %s78
      %p84 = scmp.eq.s32.totalorder %s16, 0
      %p85 = por %p83, %p84
      %p86 = scmp.ne.s32.totalorder %s75, %s78
      %p87 = scmp.eq.s32.totalorder %s21, 2
      %p88 = por %p86, %p87
      %p89 = scmp.ne.s32.totalorder %s78, %s79
      %p90 = scmp.eq.s32.totalorder %s21, 0
      %p91 = por %p89, %p90
      %p92 = scmp.ne.s32.totalorder %s78, %s79
      %p93 = scmp.eq.s32.totalorder %s22, 2
      %p94 = por %p92, %p93
      %p96 = scmp.ne.s32.totalorder %s79, %s95
      %p97 = scmp.eq.s32.totalorder %s22, 0
      %p98 = por %p96, %p97
      %s99 = ssub.s32 %s24, %s38
      %p100 = scmp.eq.s32.totalorder %s99, 0
      %s102 = sadd.s32 %s101, 1
      %s103 = scalar_select %p100, %s101, %s102
      %p106 = pneg %p100
      %p107 = scmp.eq.s32.totalorder %s16, 2
      %p108 = por %p106, %p107
      %p109 = scmp.ne.s32.totalorder %s101, %s104
      %p110 = scmp.eq.s32.totalorder %s16, 0
      %p111 = por %p109, %p110
      %p112 = scmp.ne.s32.totalorder %s101, %s104
      %p113 = scmp.eq.s32.totalorder %s21, 2
      %p114 = por %p112, %p113
      %p115 = scmp.ne.s32.totalorder %s104, %s105
      %p116 = scmp.eq.s32.totalorder %s21, 0
      %p117 = por %p115, %p116
      %p118 = scmp.ne.s32.totalorder %s104, %s105
      %p119 = scmp.eq.s32.totalorder %s22, 2
      %p120 = por %p118, %p119
      %p122 = scmp.ne.s32.totalorder %s105, %s121
      %p123 = scmp.eq.s32.totalorder %s22, 0
      %p124 = por %p122, %p123
      %s125 = ssub.s32 %s23, %s42
      %s126 = ssub.s32 %s24, %s38
      %s127 = sor.u32 %s125, %s126
      %p128 = scmp.eq.s32.totalorder %s127, 0
      %s130 = sadd.s32 %s129, 1
      %s131 = scalar_select %p128, %s129, %s130
      %p134 = pneg %p128
      %p135 = scmp.eq.s32.totalorder %s16, 2
      %p136 = por %p134, %p135
      %p137 = scmp.ne.s32.totalorder %s129, %s132
      %p138 = scmp.eq.s32.totalorder %s16, 0
      %p139 = por %p137, %p138
      %p140 = scmp.ne.s32.totalorder %s129, %s132
      %p141 = scmp.eq.s32.totalorder %s21, 2
      %p142 = por %p140, %p141
      %p143 = scmp.ne.s32.totalorder %s132, %s133
      %p144 = scmp.eq.s32.totalorder %s21, 0
      %p145 = por %p143, %p144
      %p146 = scmp.ne.s32.totalorder %s132, %s133
      %p147 = scmp.eq.s32.totalorder %s22, 2
      %p148 = por %p146, %p147
      %p150 = scmp.ne.s32.totalorder %s133, %s149
      %p151 = scmp.eq.s32.totalorder %s22, 0
      %p152 = por %p150, %p151
      %p153 = scmp.le.s32.totalorder 1, %s16
      %p154 = scmp.lt.s32.totalorder %s16, 4
      %p155 = pnand %p153, %p154
      %p156 = pneg %p155
      // Predicated region
      $region9: #{tpu_custom_call.1} parent=5 // pred_check
        _
      $region10: #{tpu_custom_call.1} parent=5 // pred_check_branch
        %158 = sbr.rel (%p155) target = $region12
      $region11: #{tpu_custom_call.1} parent=5 // pred_region
        %s159 = ssub.s32 %s16, 1
        // Predicated region
        $region13: #{tpu_custom_call.1} parent=11 // pred_check
          %p160 = pneg %p63
        $region14: #{tpu_custom_call.1} parent=11 // pred_check_branch
          %162 = sbr.rel (%p160) target = $region16
        $region15: #{tpu_custom_call.1} parent=11 // pred_region
          %s163 = smul.u32 64, %s26
          %s164 = smul.u32 2, %s28
          %166 = vsyncadd [#allocation3], 0
          %s167 = smul.addr %s163, 2
          %s168 = sadd.s32 %s164, %s167
          %s169 = smul.addr %s168, 4
          %s170 = scalar_lea.hbm %s0, %s169
          %s171 = sshll.u32 %s170, 4
          %s172 = int_to_ptr.hbm [resolvable:$true] %s171
          %s173 = sshll.u32 [#allocation2], 4
          %s174 = int_to_ptr.vmem [resolvable:$true] %s173
          %179 = dma.hbm_to_vmem [thread:$0]  %s172, 8192, %s174, [#allocation3], 128, 128, 8
        $region16: #{tpu_custom_call.1} parent=11 // pred_fallthru
          _
      $region12: #{tpu_custom_call.1} parent=5 // pred_fallthru
        _
      %p180 = scmp.lt.s32.totalorder %s16, 3
      // Predicated region
      $region17: #{tpu_custom_call.1} parent=5 // pred_check
        %p181 = pneg %p180
      $region18: #{tpu_custom_call.1} parent=5 // pred_check_branch
        %183 = sbr.rel (%p181) target = $region20
      $region19: #{tpu_custom_call.1} parent=5 // pred_region
        // Predicated region
        $region21: #{tpu_custom_call.1} parent=19 // pred_check
          %p184 = pneg %p85
        $region22: #{tpu_custom_call.1} parent=19 // pred_check_branch
          %186 = sbr.rel (%p184) target = $region24
        $region23: #{tpu_custom_call.1} parent=19 // pred_region
          %s187 = sand.u32 %s16, 1
          %s188 = scalar_lea.sflag [#allocation6], %s187
          %s189 = sand.u32 %s75, 1
          %s190 = smul.addr %s189, 256
          %s191 = scalar_lea.vmem [#allocation5], %s190
          %s192 = smul.u32 32, %s25
          %s193 = smul.u32 2, %s24
          %195 = vsyncadd %s188, 0
          %s196 = smul.addr %s192, 6
          %s197 = sadd.s32 %s193, %s196
          %s198 = smul.addr %s197, 4
          %s199 = scalar_lea.hbm %s1, %s198
          %s200 = sshll.u32 %s199, 4
          %s201 = int_to_ptr.hbm [resolvable:$true] %s200
          %s202 = sshll.u32 %s191, 4
          %s203 = int_to_ptr.vmem [resolvable:$true] %s202
          %208 = dma.hbm_to_vmem [thread:$0]  %s201, 4096, %s203, %s188, 384, 128, 8
        $region24: #{tpu_custom_call.1} parent=19 // pred_fallthru
          _
        // Predicated region
        $region25: #{tpu_custom_call.1} parent=19 // pred_check
          %p209 = pneg %p111
        $region26: #{tpu_custom_call.1} parent=19 // pred_check_branch
          %211 = sbr.rel (%p209) target = $region28
        $region27: #{tpu_custom_call.1} parent=19 // pred_region
          %s212 = sand.u32 %s16, 1
          %s213 = scalar_lea.sflag [#allocation6], %s212
          %s214 = sand.u32 %s101, 1
          %s215 = smul.addr %s214, 2
          %s216 = scalar_lea.vmem [#allocation7], %s215
          %s217 = smul.u32 2, %s24
          %219 = vsyncadd %s213, 0
          %s220 = scalar_lea.hbm %s2, %s217
          %s222 = sshll.u32 %s220, 4
          %s223 = int_to_ptr.hbm [resolvable:$true] %s222
          %s224 = sshll.u32 %s216, 4
          %s225 = int_to_ptr.vmem [resolvable:$true] %s224
          %227 = dma.hbm_to_vmem [thread:$0]  %s223, 32, %s225, %s213
        $region28: #{tpu_custom_call.1} parent=19 // pred_fallthru
          _
      $region20: #{tpu_custom_call.1} parent=5 // pred_fallthru
        _
      %p228 = scmp.le.s32.totalorder 1, %s16
      %p229 = scmp.lt.s32.totalorder %s16, 4
      %p230 = pnand %p228, %p229
      %p231 = pneg %p230
      // Predicated region
      $region29: #{tpu_custom_call.1} parent=5 // pred_check
        _
      $region30: #{tpu_custom_call.1} parent=5 // pred_check_branch
        %233 = sbr.rel (%p230) target = $region32
      $region31: #{tpu_custom_call.1} parent=5 // pred_region
        %s234 = ssub.s32 %s16, 1
        // Predicated region
        $region33: #{tpu_custom_call.1} parent=31 // pred_check
          %p235 = pneg %p63
        $region34: #{tpu_custom_call.1} parent=31 // pred_check_branch
          %237 = sbr.rel (%p235) target = $region36
        $region35: #{tpu_custom_call.1} parent=31 // pred_region
          %239 = dma.done [#allocation3], 8192
        $region36: #{tpu_custom_call.1} parent=31 // pred_fallthru
          _
        %s240 = sand.u32 %s21, 1
        %s241 = scalar_lea.sflag [#allocation6], %s240
        %s242 = sand.u32 %s78, 1
        %s243 = smul.addr %s242, 256
        %s244 = scalar_lea.vmem [#allocation5], %s243
        // Predicated region
        $region37: #{tpu_custom_call.1} parent=31 // pred_check
          %p245 = pneg %p91
        $region38: #{tpu_custom_call.1} parent=31 // pred_check_branch
          %247 = sbr.rel (%p245) target = $region40
        $region39: #{tpu_custom_call.1} parent=31 // pred_region
          %249 = dma.done %s241, 4096
        $region40: #{tpu_custom_call.1} parent=31 // pred_fallthru
          _
        %s250 = sand.u32 %s21, 1
        %s251 = scalar_lea.sflag [#allocation6], %s250
        %s252 = sand.u32 %s104, 1
        %s253 = smul.addr %s252, 2
        %s254 = scalar_lea.vmem [#allocation7], %s253
        // Predicated region
        $region41: #{tpu_custom_call.1} parent=31 // pred_check
          %p255 = pneg %p117
        $region42: #{tpu_custom_call.1} parent=31 // pred_check_branch
          %257 = sbr.rel (%p255) target = $region44
        $region43: #{tpu_custom_call.1} parent=31 // pred_region
          %259 = dma.done %s251, 32
        $region44: #{tpu_custom_call.1} parent=31 // pred_fallthru
          _
        %p260 = pneg %p63
        %p261 = pneg %p60
        %s262 = sand.u32 %s21, 1
        %s263 = scalar_lea.sflag [#allocation6], %s262
        %s264 = sand.u32 %s78, 1
        %s265 = smul.addr %s264, 256
        %s266 = scalar_lea.vmem [#allocation5], %s265
        %p267 = pneg %p91
        %p268 = pneg %p88
        %s269 = sand.u32 %s21, 1
        %s270 = scalar_lea.sflag [#allocation6], %s269
        %s271 = sand.u32 %s104, 1
        %s272 = smul.addr %s271, 2
        %s273 = scalar_lea.vmem [#allocation7], %s272
        %p274 = pneg %p117
        %p275 = pneg %p114
        %p276 = pneg %p145
        %p277 = pneg %p142
        %s278 = sand.u32 %s132, 1
        %s279 = scalar_lea.sflag [#allocation4], %s278
        %s280 = sand.u32 %s132, 1
        %s281 = smul.addr %s280, 512
        %s282 = scalar_lea.vmem [#allocation8], %s281
        %s283 = smul.u32 64, %s26
        %s284 = smul.u32 2, %s28
        %s285 = smul.u32 32, %s28
        %s286 = smul.u32 2, %s27
        %s287 = smul.u32 2, %s27
        %s288 = smul.u32 64, %s26
        %s289 = smul.u32 2, %s27
        %v290 = vld [vmem:[#allocation2] sm:$0xff]
        %v291 = vld [vmem:[#allocation2 + $0x8] sm:$0xff]
        %v292 = vld [vmem:[#allocation2 + $0x10] sm:$0xff]
        %v293 = vld [vmem:[#allocation2 + $0x18] sm:$0xff]
        %v294 = vld [vmem:[#allocation2 + $0x20] sm:$0xff]
        %v295 = vld [vmem:[#allocation2 + $0x28] sm:$0xff]
        %v296 = vld [vmem:[#allocation2 + $0x30] sm:$0xff]
        %v297 = vld [vmem:[#allocation2 + $0x38] sm:$0xff]
        %v298 = vld [vmem:[#allocation2 + $0x40] sm:$0xff]
        %v299 = vld [vmem:[#allocation2 + $0x48] sm:$0xff]
        %v300 = vld [vmem:[#allocation2 + $0x50] sm:$0xff]
        %v301 = vld [vmem:[#allocation2 + $0x58] sm:$0xff]
        %v302 = vld [vmem:[#allocation2 + $0x60] sm:$0xff]
        %v303 = vld [vmem:[#allocation2 + $0x68] sm:$0xff]
        %v304 = vld [vmem:[#allocation2 + $0x70] sm:$0xff]
        %v305 = vld [vmem:[#allocation2 + $0x78] sm:$0xff]
        %v306 = vld [vmem:[#allocation2 + $0x80] sm:$0xff]
        %v307 = vld [vmem:[#allocation2 + $0x88] sm:$0xff]
        %v308 = vld [vmem:[#allocation2 + $0x90] sm:$0xff]
        %v309 = vld [vmem:[#allocation2 + $0x98] sm:$0xff]
        %v310 = vld [vmem:[#allocation2 + $0xa0] sm:$0xff]
        %v311 = vld [vmem:[#allocation2 + $0xa8] sm:$0xff]
        %v312 = vld [vmem:[#allocation2 + $0xb0] sm:$0xff]
        %v313 = vld [vmem:[#allocation2 + $0xb8] sm:$0xff]
        %v314 = vld [vmem:[#allocation2 + $0xc0] sm:$0xff]
        %v315 = vld [vmem:[#allocation2 + $0xc8] sm:$0xff]
        %v316 = vld [vmem:[#allocation2 + $0xd0] sm:$0xff]
        %v317 = vld [vmem:[#allocation2 + $0xd8] sm:$0xff]
        %v318 = vld [vmem:[#allocation2 + $0xe0] sm:$0xff]
        %v319 = vld [vmem:[#allocation2 + $0xe8] sm:$0xff]
        %v320 = vld [vmem:[#allocation2 + $0xf0] sm:$0xff]
        %v321 = vld [vmem:[#allocation2 + $0xf8] sm:$0xff]
        %v322 = vld [vmem:[#allocation2 + $0x100] sm:$0xff]
        %v323 = vld [vmem:[#allocation2 + $0x108] sm:$0xff]
        %v324 = vld [vmem:[#allocation2 + $0x110] sm:$0xff]
        %v325 = vld [vmem:[#allocation2 + $0x118] sm:$0xff]
        %v326 = vld [vmem:[#allocation2 + $0x120] sm:$0xff]
        %v327 = vld [vmem:[#allocation2 + $0x128] sm:$0xff]
        %v328 = vld [vmem:[#allocation2 + $0x130] sm:$0xff]
        %v329 = vld [vmem:[#allocation2 + $0x138] sm:$0xff]
        %v330 = vld [vmem:[#allocation2 + $0x140] sm:$0xff]
        %v331 = vld [vmem:[#allocation2 + $0x148] sm:$0xff]
        %v332 = vld [vmem:[#allocation2 + $0x150] sm:$0xff]
        %v333 = vld [vmem:[#allocation2 + $0x158] sm:$0xff]
        %v334 = vld [vmem:[#allocation2 + $0x160] sm:$0xff]
        %v335 = vld [vmem:[#allocation2 + $0x168] sm:$0xff]
        %v336 = vld [vmem:[#allocation2 + $0x170] sm:$0xff]
        %v337 = vld [vmem:[#allocation2 + $0x178] sm:$0xff]
        %v338 = vld [vmem:[#allocation2 + $0x180] sm:$0xff]
        %v339 = vld [vmem:[#allocation2 + $0x188] sm:$0xff]
        %v340 = vld [vmem:[#allocation2 + $0x190] sm:$0xff]
        %v341 = vld [vmem:[#allocation2 + $0x198] sm:$0xff]
        %v342 = vld [vmem:[#allocation2 + $0x1a0] sm:$0xff]
        %v343 = vld [vmem:[#allocation2 + $0x1a8] sm:$0xff]
        %v344 = vld [vmem:[#allocation2 + $0x1b0] sm:$0xff]
        %v345 = vld [vmem:[#allocation2 + $0x1b8] sm:$0xff]
        %v346 = vld [vmem:[#allocation2 + $0x1c0] sm:$0xff]
        %v347 = vld [vmem:[#allocation2 + $0x1c8] sm:$0xff]
        %v348 = vld [vmem:[#allocation2 + $0x1d0] sm:$0xff]
        %v349 = vld [vmem:[#allocation2 + $0x1d8] sm:$0xff]
        %v350 = vld [vmem:[#allocation2 + $0x1e0] sm:$0xff]
        %v351 = vld [vmem:[#allocation2 + $0x1e8] sm:$0xff]
        %v352 = vld [vmem:[#allocation2 + $0x1f0] sm:$0xff]
        %v353 = vld [vmem:[#allocation2 + $0x1f8] sm:$0xff]
        %v354 = vld [vmem:[%s244] sm:$0xff]
        %v355 = vld [vmem:[%s244 + $0x8] sm:$0xff]
        %v356 = vld [vmem:[%s244 + $0x10] sm:$0xff]
        %v357 = vld [vmem:[%s244 + $0x18] sm:$0xff]
        %v358 = vld [vmem:[%s244 + $0x20] sm:$0xff]
        %v359 = vld [vmem:[%s244 + $0x28] sm:$0xff]
        %v360 = vld [vmem:[%s244 + $0x30] sm:$0xff]
        %v361 = vld [vmem:[%s244 + $0x38] sm:$0xff]
        %v362 = vld [vmem:[%s244 + $0x40] sm:$0xff]
        %v363 = vld [vmem:[%s244 + $0x48] sm:$0xff]
        %v364 = vld [vmem:[%s244 + $0x50] sm:$0xff]
        %v365 = vld [vmem:[%s244 + $0x58] sm:$0xff]
        %v366 = vld [vmem:[%s244 + $0x60] sm:$0xff]
        %v367 = vld [vmem:[%s244 + $0x68] sm:$0xff]
        %v368 = vld [vmem:[%s244 + $0x70] sm:$0xff]
        %v369 = vld [vmem:[%s244 + $0x78] sm:$0xff]
        %v370 = vld [vmem:[%s244 + $0x80] sm:$0xff]
        %v371 = vld [vmem:[%s244 + $0x88] sm:$0xff]
        %v372 = vld [vmem:[%s244 + $0x90] sm:$0xff]
        %v373 = vld [vmem:[%s244 + $0x98] sm:$0xff]
        %v374 = vld [vmem:[%s244 + $0xa0] sm:$0xff]
        %v375 = vld [vmem:[%s244 + $0xa8] sm:$0xff]
        %v376 = vld [vmem:[%s244 + $0xb0] sm:$0xff]
        %v377 = vld [vmem:[%s244 + $0xb8] sm:$0xff]
        %v378 = vld [vmem:[%s244 + $0xc0] sm:$0xff]
        %v379 = vld [vmem:[%s244 + $0xc8] sm:$0xff]
        %v380 = vld [vmem:[%s244 + $0xd0] sm:$0xff]
        %v381 = vld [vmem:[%s244 + $0xd8] sm:$0xff]
        %v382 = vld [vmem:[%s244 + $0xe0] sm:$0xff]
        %v383 = vld [vmem:[%s244 + $0xe8] sm:$0xff]
        %v384 = vld [vmem:[%s244 + $0xf0] sm:$0xff]
        %v385 = vld [vmem:[%s244 + $0xf8] sm:$0xff]
        %v386 = vld [vmem:[%s254] sm:$0x3]
        %v388 = vperm.slane %v386, 0
        %v389 = vperm.slane %v386, 1
        %v456 = vunpack.c.l.b16 %v290
        %v457 = vunpack.c.h.b16 %v290
        %v458 = vunpack.c.l.b16 %v291
        %v459 = vunpack.c.h.b16 %v291
        %v460 = vunpack.c.l.b16 %v292
        %v461 = vunpack.c.h.b16 %v292
        %v462 = vunpack.c.l.b16 %v293
        %v463 = vunpack.c.h.b16 %v293
        %v464 = vunpack.c.l.b16 %v294
        %v465 = vunpack.c.h.b16 %v294
        %v466 = vunpack.c.l.b16 %v295
        %v467 = vunpack.c.h.b16 %v295
        %v468 = vunpack.c.l.b16 %v296
        %v469 = vunpack.c.h.b16 %v296
        %v470 = vunpack.c.l.b16 %v297
        %v471 = vunpack.c.h.b16 %v297
        %v472 = vunpack.c.l.b16 %v298
        %v473 = vunpack.c.h.b16 %v298
        %v474 = vunpack.c.l.b16 %v299
        %v475 = vunpack.c.h.b16 %v299
        %v476 = vunpack.c.l.b16 %v300
        %v477 = vunpack.c.h.b16 %v300
        %v478 = vunpack.c.l.b16 %v301
        %v479 = vunpack.c.h.b16 %v301
        %v480 = vunpack.c.l.b16 %v302
        %v481 = vunpack.c.h.b16 %v302
        %v482 = vunpack.c.l.b16 %v303
        %v483 = vunpack.c.h.b16 %v303
        %v484 = vunpack.c.l.b16 %v304
        %v485 = vunpack.c.h.b16 %v304
        %v486 = vunpack.c.l.b16 %v305
        %v487 = vunpack.c.h.b16 %v305
        %v488 = vunpack.c.l.b16 %v306
        %v489 = vunpack.c.h.b16 %v306
        %v490 = vunpack.c.l.b16 %v307
        %v491 = vunpack.c.h.b16 %v307
        %v492 = vunpack.c.l.b16 %v308
        %v493 = vunpack.c.h.b16 %v308
        %v494 = vunpack.c.l.b16 %v309
        %v495 = vunpack.c.h.b16 %v309
        %v496 = vunpack.c.l.b16 %v310
        %v497 = vunpack.c.h.b16 %v310
        %v498 = vunpack.c.l.b16 %v311
        %v499 = vunpack.c.h.b16 %v311
        %v500 = vunpack.c.l.b16 %v312
        %v501 = vunpack.c.h.b16 %v312
        %v502 = vunpack.c.l.b16 %v313
        %v503 = vunpack.c.h.b16 %v313
        %v504 = vunpack.c.l.b16 %v314
        %v505 = vunpack.c.h.b16 %v314
        %v506 = vunpack.c.l.b16 %v315
        %v507 = vunpack.c.h.b16 %v315
        %v508 = vunpack.c.l.b16 %v316
        %v509 = vunpack.c.h.b16 %v316
        %v510 = vunpack.c.l.b16 %v317
        %v511 = vunpack.c.h.b16 %v317
        %v512 = vunpack.c.l.b16 %v318
        %v513 = vunpack.c.h.b16 %v318
        %v514 = vunpack.c.l.b16 %v319
        %v515 = vunpack.c.h.b16 %v319
        %v516 = vunpack.c.l.b16 %v320
        %v517 = vunpack.c.h.b16 %v320
        %v518 = vunpack.c.l.b16 %v321
        %v519 = vunpack.c.h.b16 %v321
        %v520 = vunpack.c.l.b16 %v322
        %v521 = vunpack.c.h.b16 %v322
        %v522 = vunpack.c.l.b16 %v323
        %v523 = vunpack.c.h.b16 %v323
        %v524 = vunpack.c.l.b16 %v324
        %v525 = vunpack.c.h.b16 %v324
        %v526 = vunpack.c.l.b16 %v325
        %v527 = vunpack.c.h.b16 %v325
        %v528 = vunpack.c.l.b16 %v326
        %v529 = vunpack.c.h.b16 %v326
        %v530 = vunpack.c.l.b16 %v327
        %v531 = vunpack.c.h.b16 %v327
        %v532 = vunpack.c.l.b16 %v328
        %v533 = vunpack.c.h.b16 %v328
        %v534 = vunpack.c.l.b16 %v329
        %v535 = vunpack.c.h.b16 %v329
        %v536 = vunpack.c.l.b16 %v330
        %v537 = vunpack.c.h.b16 %v330
        %v538 = vunpack.c.l.b16 %v331
        %v539 = vunpack.c.h.b16 %v331
        %v540 = vunpack.c.l.b16 %v332
        %v541 = vunpack.c.h.b16 %v332
        %v542 = vunpack.c.l.b16 %v333
        %v543 = vunpack.c.h.b16 %v333
        %v544 = vunpack.c.l.b16 %v334
        %v545 = vunpack.c.h.b16 %v334
        %v546 = vunpack.c.l.b16 %v335
        %v547 = vunpack.c.h.b16 %v335
        %v548 = vunpack.c.l.b16 %v336
        %v549 = vunpack.c.h.b16 %v336
        %v550 = vunpack.c.l.b16 %v337
        %v551 = vunpack.c.h.b16 %v337
        %v552 = vunpack.c.l.b16 %v338
        %v553 = vunpack.c.h.b16 %v338
        %v554 = vunpack.c.l.b16 %v339
        %v555 = vunpack.c.h.b16 %v339
        %v556 = vunpack.c.l.b16 %v340
        %v557 = vunpack.c.h.b16 %v340
        %v558 = vunpack.c.l.b16 %v341
        %v559 = vunpack.c.h.b16 %v341
        %v560 = vunpack.c.l.b16 %v342
        %v561 = vunpack.c.h.b16 %v342
        %v562 = vunpack.c.l.b16 %v343
        %v563 = vunpack.c.h.b16 %v343
        %v564 = vunpack.c.l.b16 %v344
        %v565 = vunpack.c.h.b16 %v344
        %v566 = vunpack.c.l.b16 %v345
        %v567 = vunpack.c.h.b16 %v345
        %v568 = vunpack.c.l.b16 %v346
        %v569 = vunpack.c.h.b16 %v346
        %v570 = vunpack.c.l.b16 %v347
        %v571 = vunpack.c.h.b16 %v347
        %v572 = vunpack.c.l.b16 %v348
        %v573 = vunpack.c.h.b16 %v348
        %v574 = vunpack.c.l.b16 %v349
        %v575 = vunpack.c.h.b16 %v349
        %v576 = vunpack.c.l.b16 %v350
        %v577 = vunpack.c.h.b16 %v350
        %v578 = vunpack.c.l.b16 %v351
        %v579 = vunpack.c.h.b16 %v351
        %v580 = vunpack.c.l.b16 %v352
        %v581 = vunpack.c.h.b16 %v352
        %v582 = vunpack.c.l.b16 %v353
        %v583 = vunpack.c.h.b16 %v353
        %v584 = vpack.c.b16 %v458, %v456
        %v585 = vpack.c.b16 %v459, %v457
        %v586 = vpack.c.b16 %v462, %v460
        %v587 = vpack.c.b16 %v463, %v461
        %v588 = vpack.c.b16 %v466, %v464
        %v589 = vpack.c.b16 %v467, %v465
        %v590 = vpack.c.b16 %v470, %v468
        %v591 = vpack.c.b16 %v471, %v469
        %v592 = vpack.c.b16 %v474, %v472
        %v593 = vpack.c.b16 %v475, %v473
        %v594 = vpack.c.b16 %v478, %v476
        %v595 = vpack.c.b16 %v479, %v477
        %v596 = vpack.c.b16 %v482, %v480
        %v597 = vpack.c.b16 %v483, %v481
        %v598 = vpack.c.b16 %v486, %v484
        %v599 = vpack.c.b16 %v487, %v485
        %v600 = vpack.c.b16 %v490, %v488
        %v601 = vpack.c.b16 %v491, %v489
        %v602 = vpack.c.b16 %v494, %v492
        %v603 = vpack.c.b16 %v495, %v493
        %v604 = vpack.c.b16 %v498, %v496
        %v605 = vpack.c.b16 %v499, %v497
        %v606 = vpack.c.b16 %v502, %v500
        %v607 = vpack.c.b16 %v503, %v501
        %v608 = vpack.c.b16 %v506, %v504
        %v609 = vpack.c.b16 %v507, %v505
        %v610 = vpack.c.b16 %v510, %v508
        %v611 = vpack.c.b16 %v511, %v509
        %v612 = vpack.c.b16 %v514, %v512
        %v613 = vpack.c.b16 %v515, %v513
        %v614 = vpack.c.b16 %v518, %v516
        %v615 = vpack.c.b16 %v519, %v517
        %v616 = vpack.c.b16 %v522, %v520
        %v617 = vpack.c.b16 %v523, %v521
        %v618 = vpack.c.b16 %v526, %v524
        %v619 = vpack.c.b16 %v527, %v525
        %v620 = vpack.c.b16 %v530, %v528
        %v621 = vpack.c.b16 %v531, %v529
        %v622 = vpack.c.b16 %v534, %v532
        %v623 = vpack.c.b16 %v535, %v533
        %v624 = vpack.c.b16 %v538, %v536
        %v625 = vpack.c.b16 %v539, %v537
        %v626 = vpack.c.b16 %v542, %v540
        %v627 = vpack.c.b16 %v543, %v541
        %v628 = vpack.c.b16 %v546, %v544
        %v629 = vpack.c.b16 %v547, %v545
        %v630 = vpack.c.b16 %v550, %v548
        %v631 = vpack.c.b16 %v551, %v549
        %v632 = vpack.c.b16 %v554, %v552
        %v633 = vpack.c.b16 %v555, %v553
        %v634 = vpack.c.b16 %v558, %v556
        %v635 = vpack.c.b16 %v559, %v557
        %v636 = vpack.c.b16 %v562, %v560
        %v637 = vpack.c.b16 %v563, %v561
        %v638 = vpack.c.b16 %v566, %v564
        %v639 = vpack.c.b16 %v567, %v565
        %v640 = vpack.c.b16 %v570, %v568
        %v641 = vpack.c.b16 %v571, %v569
        %v642 = vpack.c.b16 %v574, %v572
        %v643 = vpack.c.b16 %v575, %v573
        %v644 = vpack.c.b16 %v578, %v576
        %v645 = vpack.c.b16 %v579, %v577
        %v646 = vpack.c.b16 %v582, %v580
        %v647 = vpack.c.b16 %v583, %v581
        %v744 = vunpack.c.l.b16 %v354
        %v745 = vunpack.c.h.b16 %v354
        %v746 = vunpack.c.l.b16 %v355
        %v747 = vunpack.c.h.b16 %v355
        %v748 = vunpack.c.l.b16 %v356
        %v749 = vunpack.c.h.b16 %v356
        %v750 = vunpack.c.l.b16 %v357
        %v751 = vunpack.c.h.b16 %v357
        %v752 = vunpack.c.l.b16 %v358
        %v753 = vunpack.c.h.b16 %v358
        %v754 = vunpack.c.l.b16 %v359
        %v755 = vunpack.c.h.b16 %v359
        %v756 = vunpack.c.l.b16 %v360
        %v757 = vunpack.c.h.b16 %v360
        %v758 = vunpack.c.l.b16 %v361
        %v759 = vunpack.c.h.b16 %v361
        %v760 = vunpack.c.l.b16 %v362
        %v761 = vunpack.c.h.b16 %v362
        %v762 = vunpack.c.l.b16 %v363
        %v763 = vunpack.c.h.b16 %v363
        %v764 = vunpack.c.l.b16 %v364
        %v765 = vunpack.c.h.b16 %v364
        %v766 = vunpack.c.l.b16 %v365
        %v767 = vunpack.c.h.b16 %v365
        %v768 = vunpack.c.l.b16 %v366
        %v769 = vunpack.c.h.b16 %v366
        %v770 = vunpack.c.l.b16 %v367
        %v771 = vunpack.c.h.b16 %v367
        %v772 = vunpack.c.l.b16 %v368
        %v773 = vunpack.c.h.b16 %v368
        %v774 = vunpack.c.l.b16 %v369
        %v775 = vunpack.c.h.b16 %v369
        %v776 = vunpack.c.l.b16 %v370
        %v777 = vunpack.c.h.b16 %v370
        %v778 = vunpack.c.l.b16 %v371
        %v779 = vunpack.c.h.b16 %v371
        %v780 = vunpack.c.l.b16 %v372
        %v781 = vunpack.c.h.b16 %v372
        %v782 = vunpack.c.l.b16 %v373
        %v783 = vunpack.c.h.b16 %v373
        %v784 = vunpack.c.l.b16 %v374
        %v785 = vunpack.c.h.b16 %v374
        %v786 = vunpack.c.l.b16 %v375
        %v787 = vunpack.c.h.b16 %v375
        %v788 = vunpack.c.l.b16 %v376
        %v789 = vunpack.c.h.b16 %v376
        %v790 = vunpack.c.l.b16 %v377
        %v791 = vunpack.c.h.b16 %v377
        %v792 = vunpack.c.l.b16 %v378
        %v793 = vunpack.c.h.b16 %v378
        %v794 = vunpack.c.l.b16 %v379
        %v795 = vunpack.c.h.b16 %v379
        %v796 = vunpack.c.l.b16 %v380
        %v797 = vunpack.c.h.b16 %v380
        %v798 = vunpack.c.l.b16 %v381
        %v799 = vunpack.c.h.b16 %v381
        %v800 = vunpack.c.l.b16 %v382
        %v801 = vunpack.c.h.b16 %v382
        %v802 = vunpack.c.l.b16 %v383
        %v803 = vunpack.c.h.b16 %v383
        %v804 = vunpack.c.l.b16 %v384
        %v805 = vunpack.c.h.b16 %v384
        %v806 = vunpack.c.l.b16 %v385
        %v807 = vunpack.c.h.b16 %v385
        %v808 = vpack.c.b16 %v746, %v744
        %v809 = vpack.c.b16 %v747, %v745
        %v810 = vpack.c.b16 %v750, %v748
        %v811 = vpack.c.b16 %v751, %v749
        %v812 = vpack.c.b16 %v754, %v752
        %v813 = vpack.c.b16 %v755, %v753
        %v814 = vpack.c.b16 %v758, %v756
        %v815 = vpack.c.b16 %v759, %v757
        %v816 = vpack.c.b16 %v762, %v760
        %v817 = vpack.c.b16 %v763, %v761
        %v818 = vpack.c.b16 %v766, %v764
        %v819 = vpack.c.b16 %v767, %v765
        %v820 = vpack.c.b16 %v770, %v768
        %v821 = vpack.c.b16 %v771, %v769
        %v822 = vpack.c.b16 %v774, %v772
        %v823 = vpack.c.b16 %v775, %v773
        %v824 = vpack.c.b16 %v778, %v776
        %v825 = vpack.c.b16 %v779, %v777
        %v826 = vpack.c.b16 %v782, %v780
        %v827 = vpack.c.b16 %v783, %v781
        %v828 = vpack.c.b16 %v786, %v784
        %v829 = vpack.c.b16 %v787, %v785
        %v830 = vpack.c.b16 %v790, %v788
        %v831 = vpack.c.b16 %v791, %v789
        %v832 = vpack.c.b16 %v794, %v792
        %v833 = vpack.c.b16 %v795, %v793
        %v834 = vpack.c.b16 %v798, %v796
        %v835 = vpack.c.b16 %v799, %v797
        %v836 = vpack.c.b16 %v802, %v800
        %v837 = vpack.c.b16 %v803, %v801
        %v838 = vpack.c.b16 %v806, %v804
        %v839 = vpack.c.b16 %v807, %v805
        %872 = vmatpush.bf16.msra.mxu0 %v822
        %873 = vmatpush.bf16.msra.mxu0 %v820
        %874 = vmatpush.bf16.msra.mxu0 %v818
        %875 = vmatpush.bf16.msra.mxu0 %v816
        %876 = vmatpush.bf16.msra.mxu0 %v814
        %877 = vmatpush.bf16.msra.mxu0 %v812
        %878 = vmatpush.bf16.msra.mxu0 %v810
        %879 = vmatpush.bf16.msra.mxu0 %v808
        %880 = vmatmul.bf16.gmra.mxu0 %v584
        %v881 = vpop.f32.mrf.mxu0
        %v882 = vadd.f32 %v388, %v881
        %v883 = vpop.f32.mrf.mxu0
        %v884 = vadd.f32 %v388, %v883
        %885 = vmatmul.bf16.gmra.mxu0 %v586
        %v886 = vpop.f32.mrf.mxu0
        %v887 = vadd.f32 %v388, %v886
        %v888 = vpop.f32.mrf.mxu0
        %v889 = vadd.f32 %v388, %v888
        %890 = vmatmul.bf16.gmra.mxu0 %v588
        %v891 = vpop.f32.mrf.mxu0
        %v892 = vadd.f32 %v388, %v891
        %v893 = vpop.f32.mrf.mxu0
        %v894 = vadd.f32 %v388, %v893
        %895 = vmatmul.bf16.gmra.mxu0 %v590
        %v896 = vpop.f32.mrf.mxu0
        %v897 = vadd.f32 %v388, %v896
        %v898 = vpop.f32.mrf.mxu0
        %v899 = vadd.f32 %v388, %v898
        %900 = vmatmul.bf16.gmra.mxu0 %v592
        %v901 = vpop.f32.mrf.mxu0
        %v902 = vadd.f32 %v388, %v901
        %v903 = vpop.f32.mrf.mxu0
        %v904 = vadd.f32 %v388, %v903
        %905 = vmatmul.bf16.gmra.mxu0 %v594
        %v906 = vpop.f32.mrf.mxu0
        %v907 = vadd.f32 %v388, %v906
        %v908 = vpop.f32.mrf.mxu0
        %v909 = vadd.f32 %v388, %v908
        %910 = vmatmul.bf16.gmra.mxu0 %v596
        %v911 = vpop.f32.mrf.mxu0
        %v912 = vadd.f32 %v388, %v911
        %v913 = vpop.f32.mrf.mxu0
        %v914 = vadd.f32 %v388, %v913
        %915 = vmatmul.bf16.gmra.mxu0 %v598
        %v916 = vpop.f32.mrf.mxu0
        %v917 = vadd.f32 %v388, %v916
        %v918 = vpop.f32.mrf.mxu0
        %v919 = vadd.f32 %v388, %v918
        %920 = vmatmul.bf16.gmra.mxu0 %v600
        %v921 = vpop.f32.mrf.mxu0
        %v922 = vadd.f32 %v388, %v921
        %v923 = vpop.f32.mrf.mxu0
        %v924 = vadd.f32 %v388, %v923
        %925 = vmatmul.bf16.gmra.mxu0 %v602
        %v926 = vpop.f32.mrf.mxu0
        %v927 = vadd.f32 %v388, %v926
        %v928 = vpop.f32.mrf.mxu0
        %v929 = vadd.f32 %v388, %v928
        %930 = vmatmul.bf16.gmra.mxu0 %v604
        %v931 = vpop.f32.mrf.mxu0
        %v932 = vadd.f32 %v388, %v931
        %v933 = vpop.f32.mrf.mxu0
        %v934 = vadd.f32 %v388, %v933
        %935 = vmatmul.bf16.gmra.mxu0 %v606
        %v936 = vpop.f32.mrf.mxu0
        %v937 = vadd.f32 %v388, %v936
        %v938 = vpop.f32.mrf.mxu0
        %v939 = vadd.f32 %v388, %v938
        %940 = vmatmul.bf16.gmra.mxu0 %v608
        %v941 = vpop.f32.mrf.mxu0
        %v942 = vadd.f32 %v388, %v941
        %v943 = vpop.f32.mrf.mxu0
        %v944 = vadd.f32 %v388, %v943
        %945 = vmatmul.bf16.gmra.mxu0 %v610
        %v946 = vpop.f32.mrf.mxu0
        %v947 = vadd.f32 %v388, %v946
        %v948 = vpop.f32.mrf.mxu0
        %v949 = vadd.f32 %v388, %v948
        %950 = vmatmul.bf16.gmra.mxu0 %v612
        %v951 = vpop.f32.mrf.mxu0
        %v952 = vadd.f32 %v388, %v951
        %v953 = vpop.f32.mrf.mxu0
        %v954 = vadd.f32 %v388, %v953
        %955 = vmatmul.bf16.gmra.mxu0 %v614
        %v956 = vpop.f32.mrf.mxu0
        %v957 = vadd.f32 %v388, %v956
        %v958 = vpop.f32.mrf.mxu0
        %v959 = vadd.f32 %v388, %v958
        %960 = vmatmul.bf16.gmra.mxu0 %v616
        %v961 = vpop.f32.mrf.mxu0
        %v962 = vadd.f32 %v388, %v961
        %v963 = vpop.f32.mrf.mxu0
        %v964 = vadd.f32 %v388, %v963
        %965 = vmatmul.bf16.gmra.mxu0 %v618
        %v966 = vpop.f32.mrf.mxu0
        %v967 = vadd.f32 %v388, %v966
        %v968 = vpop.f32.mrf.mxu0
        %v969 = vadd.f32 %v388, %v968
        %970 = vmatmul.bf16.gmra.mxu0 %v620
        %v971 = vpop.f32.mrf.mxu0
        %v972 = vadd.f32 %v388, %v971
        %v973 = vpop.f32.mrf.mxu0
        %v974 = vadd.f32 %v388, %v973
        %975 = vmatmul.bf16.gmra.mxu0 %v622
        %v976 = vpop.f32.mrf.mxu0
        %v977 = vadd.f32 %v388, %v976
        %v978 = vpop.f32.mrf.mxu0
        %v979 = vadd.f32 %v388, %v978
        %980 = vmatmul.bf16.gmra.mxu0 %v624
        %v981 = vpop.f32.mrf.mxu0
        %v982 = vadd.f32 %v388, %v981
        %v983 = vpop.f32.mrf.mxu0
        %v984 = vadd.f32 %v388, %v983
        %985 = vmatmul.bf16.gmra.mxu0 %v626
        %v986 = vpop.f32.mrf.mxu0
        %v987 = vadd.f32 %v388, %v986
        %v988 = vpop.f32.mrf.mxu0
        %v989 = vadd.f32 %v388, %v988
        %990 = vmatmul.bf16.gmra.mxu0 %v628
        %v991 = vpop.f32.mrf.mxu0
        %v992 = vadd.f32 %v388, %v991
        %v993 = vpop.f32.mrf.mxu0
        %v994 = vadd.f32 %v388, %v993
        %995 = vmatmul.bf16.gmra.mxu0 %v630
        %v996 = vpop.f32.mrf.mxu0
        %v997 = vadd.f32 %v388, %v996
        %v998 = vpop.f32.mrf.mxu0
        %v999 = vadd.f32 %v388, %v998
        %1000 = vmatmul.bf16.gmra.mxu0 %v632
        %v1001 = vpop.f32.mrf.mxu0
        %v1002 = vadd.f32 %v388, %v1001
        %v1003 = vpop.f32.mrf.mxu0
        %v1004 = vadd.f32 %v388, %v1003
        %1005 = vmatmul.bf16.gmra.mxu0 %v634
        %v1006 = vpop.f32.mrf.mxu0
        %v1007 = vadd.f32 %v388, %v1006
        %v1008 = vpop.f32.mrf.mxu0
        %v1009 = vadd.f32 %v388, %v1008
        %1010 = vmatmul.bf16.gmra.mxu0 %v636
        %v1011 = vpop.f32.mrf.mxu0
        %v1012 = vadd.f32 %v388, %v1011
        %v1013 = vpop.f32.mrf.mxu0
        %v1014 = vadd.f32 %v388, %v1013
        %1015 = vmatmul.bf16.gmra.mxu0 %v638
        %v1016 = vpop.f32.mrf.mxu0
        %v1017 = vadd.f32 %v388, %v1016
        %v1018 = vpop.f32.mrf.mxu0
        %v1019 = vadd.f32 %v388, %v1018
        %1020 = vmatmul.bf16.gmra.mxu0 %v640
        %v1021 = vpop.f32.mrf.mxu0
        %v1022 = vadd.f32 %v388, %v1021
        %v1023 = vpop.f32.mrf.mxu0
        %v1024 = vadd.f32 %v388, %v1023
        %1025 = vmatmul.bf16.gmra.mxu0 %v642
        %v1026 = vpop.f32.mrf.mxu0
        %v1027 = vadd.f32 %v388, %v1026
        %v1028 = vpop.f32.mrf.mxu0
        %v1029 = vadd.f32 %v388, %v1028
        %1030 = vmatmul.bf16.gmra.mxu0 %v644
        %v1031 = vpop.f32.mrf.mxu0
        %v1032 = vadd.f32 %v388, %v1031
        %v1033 = vpop.f32.mrf.mxu0
        %v1034 = vadd.f32 %v388, %v1033
        %1035 = vmatmul.bf16.gmra.mxu0 %v646
        %v1036 = vpop.f32.mrf.mxu0
        %v1037 = vadd.f32 %v388, %v1036
        %v1038 = vpop.f32.mrf.mxu0
        %v1039 = vadd.f32 %v388, %v1038
        %1040 = vdwg.mxu0
        %1041 = vmatpush.bf16.msra.mxu0 %v838
        %1042 = vmatpush.bf16.msra.mxu0 %v836
        %1043 = vmatpush.bf16.msra.mxu0 %v834
        %1044 = vmatpush.bf16.msra.mxu0 %v832
        %1045 = vmatpush.bf16.msra.mxu0 %v830
        %1046 = vmatpush.bf16.msra.mxu0 %v828
        %1047 = vmatpush.bf16.msra.mxu0 %v826
        %1048 = vmatpush.bf16.msra.mxu0 %v824
        %1049 = vmatmul.bf16.gmra.mxu0 %v585
        %v1050 = vpop.f32.mrf.mxu0
        %v1051 = vadd.f32 %v882, %v1050
        %v1052 = vpop.f32.mrf.mxu0
        %v1053 = vadd.f32 %v884, %v1052
        %1054 = vmatmul.bf16.gmra.mxu0 %v587
        %v1055 = vpop.f32.mrf.mxu0
        %v1056 = vadd.f32 %v887, %v1055
        %v1057 = vpop.f32.mrf.mxu0
        %v1058 = vadd.f32 %v889, %v1057
        %1059 = vmatmul.bf16.gmra.mxu0 %v589
        %v1060 = vpop.f32.mrf.mxu0
        %v1061 = vadd.f32 %v892, %v1060
        %v1062 = vpop.f32.mrf.mxu0
        %v1063 = vadd.f32 %v894, %v1062
        %1064 = vmatmul.bf16.gmra.mxu0 %v591
        %v1065 = vpop.f32.mrf.mxu0
        %v1066 = vadd.f32 %v897, %v1065
        %v1067 = vpop.f32.mrf.mxu0
        %v1068 = vadd.f32 %v899, %v1067
        %1069 = vmatmul.bf16.gmra.mxu0 %v593
        %v1070 = vpop.f32.mrf.mxu0
        %v1071 = vadd.f32 %v902, %v1070
        %v1072 = vpop.f32.mrf.mxu0
        %v1073 = vadd.f32 %v904, %v1072
        %1074 = vmatmul.bf16.gmra.mxu0 %v595
        %v1075 = vpop.f32.mrf.mxu0
        %v1076 = vadd.f32 %v907, %v1075
        %v1077 = vpop.f32.mrf.mxu0
        %v1078 = vadd.f32 %v909, %v1077
        %1079 = vmatmul.bf16.gmra.mxu0 %v597
        %v1080 = vpop.f32.mrf.mxu0
        %v1081 = vadd.f32 %v912, %v1080
        %v1082 = vpop.f32.mrf.mxu0
        %v1083 = vadd.f32 %v914, %v1082
        %1084 = vmatmul.bf16.gmra.mxu0 %v599
        %v1085 = vpop.f32.mrf.mxu0
        %v1086 = vadd.f32 %v917, %v1085
        %v1087 = vpop.f32.mrf.mxu0
        %v1088 = vadd.f32 %v919, %v1087
        %1089 = vmatmul.bf16.gmra.mxu0 %v601
        %v1090 = vpop.f32.mrf.mxu0
        %v1091 = vadd.f32 %v922, %v1090
        %v1092 = vpop.f32.mrf.mxu0
        %v1093 = vadd.f32 %v924, %v1092
        %1094 = vmatmul.bf16.gmra.mxu0 %v603
        %v1095 = vpop.f32.mrf.mxu0
        %v1096 = vadd.f32 %v927, %v1095
        %v1097 = vpop.f32.mrf.mxu0
        %v1098 = vadd.f32 %v929, %v1097
        %1099 = vmatmul.bf16.gmra.mxu0 %v605
        %v1100 = vpop.f32.mrf.mxu0
        %v1101 = vadd.f32 %v932, %v1100
        %v1102 = vpop.f32.mrf.mxu0
        %v1103 = vadd.f32 %v934, %v1102
        %1104 = vmatmul.bf16.gmra.mxu0 %v607
        %v1105 = vpop.f32.mrf.mxu0
        %v1106 = vadd.f32 %v937, %v1105
        %v1107 = vpop.f32.mrf.mxu0
        %v1108 = vadd.f32 %v939, %v1107
        %1109 = vmatmul.bf16.gmra.mxu0 %v609
        %v1110 = vpop.f32.mrf.mxu0
        %v1111 = vadd.f32 %v942, %v1110
        %v1112 = vpop.f32.mrf.mxu0
        %v1113 = vadd.f32 %v944, %v1112
        %1114 = vmatmul.bf16.gmra.mxu0 %v611
        %v1115 = vpop.f32.mrf.mxu0
        %v1116 = vadd.f32 %v947, %v1115
        %v1117 = vpop.f32.mrf.mxu0
        %v1118 = vadd.f32 %v949, %v1117
        %1119 = vmatmul.bf16.gmra.mxu0 %v613
        %v1120 = vpop.f32.mrf.mxu0
        %v1121 = vadd.f32 %v952, %v1120
        %v1122 = vpop.f32.mrf.mxu0
        %v1123 = vadd.f32 %v954, %v1122
        %1124 = vmatmul.bf16.gmra.mxu0 %v615
        %v1125 = vpop.f32.mrf.mxu0
        %v1126 = vadd.f32 %v957, %v1125
        %v1127 = vpop.f32.mrf.mxu0
        %v1128 = vadd.f32 %v959, %v1127
        %1129 = vmatmul.bf16.gmra.mxu0 %v617
        %v1130 = vpop.f32.mrf.mxu0
        %v1131 = vadd.f32 %v962, %v1130
        %v1132 = vpop.f32.mrf.mxu0
        %v1133 = vadd.f32 %v964, %v1132
        %1134 = vmatmul.bf16.gmra.mxu0 %v619
        %v1135 = vpop.f32.mrf.mxu0
        %v1136 = vadd.f32 %v967, %v1135
        %v1137 = vpop.f32.mrf.mxu0
        %v1138 = vadd.f32 %v969, %v1137
        %1139 = vmatmul.bf16.gmra.mxu0 %v621
        %v1140 = vpop.f32.mrf.mxu0
        %v1141 = vadd.f32 %v972, %v1140
        %v1142 = vpop.f32.mrf.mxu0
        %v1143 = vadd.f32 %v974, %v1142
        %1144 = vmatmul.bf16.gmra.mxu0 %v623
        %v1145 = vpop.f32.mrf.mxu0
        %v1146 = vadd.f32 %v977, %v1145
        %v1147 = vpop.f32.mrf.mxu0
        %v1148 = vadd.f32 %v979, %v1147
        %1149 = vmatmul.bf16.gmra.mxu0 %v625
        %v1150 = vpop.f32.mrf.mxu0
        %v1151 = vadd.f32 %v982, %v1150
        %v1152 = vpop.f32.mrf.mxu0
        %v1153 = vadd.f32 %v984, %v1152
        %1154 = vmatmul.bf16.gmra.mxu0 %v627
        %v1155 = vpop.f32.mrf.mxu0
        %v1156 = vadd.f32 %v987, %v1155
        %v1157 = vpop.f32.mrf.mxu0
        %v1158 = vadd.f32 %v989, %v1157
        %1159 = vmatmul.bf16.gmra.mxu0 %v629
        %v1160 = vpop.f32.mrf.mxu0
        %v1161 = vadd.f32 %v992, %v1160
        %v1162 = vpop.f32.mrf.mxu0
        %v1163 = vadd.f32 %v994, %v1162
        %1164 = vmatmul.bf16.gmra.mxu0 %v631
        %v1165 = vpop.f32.mrf.mxu0
        %v1166 = vadd.f32 %v997, %v1165
        %v1167 = vpop.f32.mrf.mxu0
        %v1168 = vadd.f32 %v999, %v1167
        %1169 = vmatmul.bf16.gmra.mxu0 %v633
        %v1170 = vpop.f32.mrf.mxu0
        %v1171 = vadd.f32 %v1002, %v1170
        %v1172 = vpop.f32.mrf.mxu0
        %v1173 = vadd.f32 %v1004, %v1172
        %1174 = vmatmul.bf16.gmra.mxu0 %v635
        %v1175 = vpop.f32.mrf.mxu0
        %v1176 = vadd.f32 %v1007, %v1175
        %v1177 = vpop.f32.mrf.mxu0
        %v1178 = vadd.f32 %v1009, %v1177
        %1179 = vmatmul.bf16.gmra.mxu0 %v637
        %v1180 = vpop.f32.mrf.mxu0
        %v1181 = vadd.f32 %v1012, %v1180
        %v1182 = vpop.f32.mrf.mxu0
        %v1183 = vadd.f32 %v1014, %v1182
        %1184 = vmatmul.bf16.gmra.mxu0 %v639
        %v1185 = vpop.f32.mrf.mxu0
        %v1186 = vadd.f32 %v1017, %v1185
        %v1187 = vpop.f32.mrf.mxu0
        %v1188 = vadd.f32 %v1019, %v1187
        %1189 = vmatmul.bf16.gmra.mxu0 %v641
        %v1190 = vpop.f32.mrf.mxu0
        %v1191 = vadd.f32 %v1022, %v1190
        %v1192 = vpop.f32.mrf.mxu0
        %v1193 = vadd.f32 %v1024, %v1192
        %1194 = vmatmul.bf16.gmra.mxu0 %v643
        %v1195 = vpop.f32.mrf.mxu0
        %v1196 = vadd.f32 %v1027, %v1195
        %v1197 = vpop.f32.mrf.mxu0
        %v1198 = vadd.f32 %v1029, %v1197
        %1199 = vmatmul.bf16.gmra.mxu0 %v645
        %v1200 = vpop.f32.mrf.mxu0
        %v1201 = vadd.f32 %v1032, %v1200
        %v1202 = vpop.f32.mrf.mxu0
        %v1203 = vadd.f32 %v1034, %v1202
        %1204 = vmatmul.bf16.gmra.mxu0 %v647
        %v1205 = vpop.f32.mrf.mxu0
        %v1206 = vadd.f32 %v1037, %v1205
        %v1207 = vpop.f32.mrf.mxu0
        %v1208 = vadd.f32 %v1039, %v1207
        %1209 = vdwg.mxu0
        %1210 = vmatpush.bf16.msra.mxu0 %v823
        %1211 = vmatpush.bf16.msra.mxu0 %v821
        %1212 = vmatpush.bf16.msra.mxu0 %v819
        %1213 = vmatpush.bf16.msra.mxu0 %v817
        %1214 = vmatpush.bf16.msra.mxu0 %v815
        %1215 = vmatpush.bf16.msra.mxu0 %v813
        %1216 = vmatpush.bf16.msra.mxu0 %v811
        %1217 = vmatpush.bf16.msra.mxu0 %v809
        %1218 = vmatmul.bf16.gmra.mxu0 %v584
        %v1219 = vpop.f32.mrf.mxu0
        %v1220 = vadd.f32 %v389, %v1219
        %v1221 = vpop.f32.mrf.mxu0
        %v1222 = vadd.f32 %v389, %v1221
        %1223 = vmatmul.bf16.gmra.mxu0 %v586
        %v1224 = vpop.f32.mrf.mxu0
        %v1225 = vadd.f32 %v389, %v1224
        %v1226 = vpop.f32.mrf.mxu0
        %v1227 = vadd.f32 %v389, %v1226
        %1228 = vmatmul.bf16.gmra.mxu0 %v588
        %v1229 = vpop.f32.mrf.mxu0
        %v1230 = vadd.f32 %v389, %v1229
        %v1231 = vpop.f32.mrf.mxu0
        %v1232 = vadd.f32 %v389, %v1231
        %1233 = vmatmul.bf16.gmra.mxu0 %v590
        %v1234 = vpop.f32.mrf.mxu0
        %v1235 = vadd.f32 %v389, %v1234
        %v1236 = vpop.f32.mrf.mxu0
        %v1237 = vadd.f32 %v389, %v1236
        %1238 = vmatmul.bf16.gmra.mxu0 %v592
        %v1239 = vpop.f32.mrf.mxu0
        %v1240 = vadd.f32 %v389, %v1239
        %v1241 = vpop.f32.mrf.mxu0
        %v1242 = vadd.f32 %v389, %v1241
        %1243 = vmatmul.bf16.gmra.mxu0 %v594
        %v1244 = vpop.f32.mrf.mxu0
        %v1245 = vadd.f32 %v389, %v1244
        %v1246 = vpop.f32.mrf.mxu0
        %v1247 = vadd.f32 %v389, %v1246
        %1248 = vmatmul.bf16.gmra.mxu0 %v596
        %v1249 = vpop.f32.mrf.mxu0
        %v1250 = vadd.f32 %v389, %v1249
        %v1251 = vpop.f32.mrf.mxu0
        %v1252 = vadd.f32 %v389, %v1251
        %1253 = vmatmul.bf16.gmra.mxu0 %v598
        %v1254 = vpop.f32.mrf.mxu0
        %v1255 = vadd.f32 %v389, %v1254
        %v1256 = vpop.f32.mrf.mxu0
        %v1257 = vadd.f32 %v389, %v1256
        %1258 = vmatmul.bf16.gmra.mxu0 %v600
        %v1259 = vpop.f32.mrf.mxu0
        %v1260 = vadd.f32 %v389, %v1259
        %v1261 = vpop.f32.mrf.mxu0
        %v1262 = vadd.f32 %v389, %v1261
        %1263 = vmatmul.bf16.gmra.mxu0 %v602
        %v1264 = vpop.f32.mrf.mxu0
        %v1265 = vadd.f32 %v389, %v1264
        %v1266 = vpop.f32.mrf.mxu0
        %v1267 = vadd.f32 %v389, %v1266
        %1268 = vmatmul.bf16.gmra.mxu0 %v604
        %v1269 = vpop.f32.mrf.mxu0
        %v1270 = vadd.f32 %v389, %v1269
        %v1271 = vpop.f32.mrf.mxu0
        %v1272 = vadd.f32 %v389, %v1271
        %1273 = vmatmul.bf16.gmra.mxu0 %v606
        %v1274 = vpop.f32.mrf.mxu0
        %v1275 = vadd.f32 %v389, %v1274
        %v1276 = vpop.f32.mrf.mxu0
        %v1277 = vadd.f32 %v389, %v1276
        %1278 = vmatmul.bf16.gmra.mxu0 %v608
        %v1279 = vpop.f32.mrf.mxu0
        %v1280 = vadd.f32 %v389, %v1279
        %v1281 = vpop.f32.mrf.mxu0
        %v1282 = vadd.f32 %v389, %v1281
        %1283 = vmatmul.bf16.gmra.mxu0 %v610
        %v1284 = vpop.f32.mrf.mxu0
        %v1285 = vadd.f32 %v389, %v1284
        %v1286 = vpop.f32.mrf.mxu0
        %v1287 = vadd.f32 %v389, %v1286
        %1288 = vmatmul.bf16.gmra.mxu0 %v612
        %v1289 = vpop.f32.mrf.mxu0
        %v1290 = vadd.f32 %v389, %v1289
        %v1291 = vpop.f32.mrf.mxu0
        %v1292 = vadd.f32 %v389, %v1291
        %1293 = vmatmul.bf16.gmra.mxu0 %v614
        %v1294 = vpop.f32.mrf.mxu0
        %v1295 = vadd.f32 %v389, %v1294
        %v1296 = vpop.f32.mrf.mxu0
        %v1297 = vadd.f32 %v389, %v1296
        %1298 = vmatmul.bf16.gmra.mxu0 %v616
        %v1299 = vpop.f32.mrf.mxu0
        %v1300 = vadd.f32 %v389, %v1299
        %v1301 = vpop.f32.mrf.mxu0
        %v1302 = vadd.f32 %v389, %v1301
        %1303 = vmatmul.bf16.gmra.mxu0 %v618
        %v1304 = vpop.f32.mrf.mxu0
        %v1305 = vadd.f32 %v389, %v1304
        %v1306 = vpop.f32.mrf.mxu0
        %v1307 = vadd.f32 %v389, %v1306
        %1308 = vmatmul.bf16.gmra.mxu0 %v620
        %v1309 = vpop.f32.mrf.mxu0
        %v1310 = vadd.f32 %v389, %v1309
        %v1311 = vpop.f32.mrf.mxu0
        %v1312 = vadd.f32 %v389, %v1311
        %1313 = vmatmul.bf16.gmra.mxu0 %v622
        %v1314 = vpop.f32.mrf.mxu0
        %v1315 = vadd.f32 %v389, %v1314
        %v1316 = vpop.f32.mrf.mxu0
        %v1317 = vadd.f32 %v389, %v1316
        %1318 = vmatmul.bf16.gmra.mxu0 %v624
        %v1319 = vpop.f32.mrf.mxu0
        %v1320 = vadd.f32 %v389, %v1319
        %v1321 = vpop.f32.mrf.mxu0
        %v1322 = vadd.f32 %v389, %v1321
        %1323 = vmatmul.bf16.gmra.mxu0 %v626
        %v1324 = vpop.f32.mrf.mxu0
        %v1325 = vadd.f32 %v389, %v1324
        %v1326 = vpop.f32.mrf.mxu0
        %v1327 = vadd.f32 %v389, %v1326
        %1328 = vmatmul.bf16.gmra.mxu0 %v628
        %v1329 = vpop.f32.mrf.mxu0
        %v1330 = vadd.f32 %v389, %v1329
        %v1331 = vpop.f32.mrf.mxu0
        %v1332 = vadd.f32 %v389, %v1331
        %1333 = vmatmul.bf16.gmra.mxu0 %v630
        %v1334 = vpop.f32.mrf.mxu0
        %v1335 = vadd.f32 %v389, %v1334
        %v1336 = vpop.f32.mrf.mxu0
        %v1337 = vadd.f32 %v389, %v1336
        %1338 = vmatmul.bf16.gmra.mxu0 %v632
        %v1339 = vpop.f32.mrf.mxu0
        %v1340 = vadd.f32 %v389, %v1339
        %v1341 = vpop.f32.mrf.mxu0
        %v1342 = vadd.f32 %v389, %v1341
        %1343 = vmatmul.bf16.gmra.mxu0 %v634
        %v1344 = vpop.f32.mrf.mxu0
        %v1345 = vadd.f32 %v389, %v1344
        %v1346 = vpop.f32.mrf.mxu0
        %v1347 = vadd.f32 %v389, %v1346
        %1348 = vmatmul.bf16.gmra.mxu0 %v636
        %v1349 = vpop.f32.mrf.mxu0
        %v1350 = vadd.f32 %v389, %v1349
        %v1351 = vpop.f32.mrf.mxu0
        %v1352 = vadd.f32 %v389, %v1351
        %1353 = vmatmul.bf16.gmra.mxu0 %v638
        %v1354 = vpop.f32.mrf.mxu0
        %v1355 = vadd.f32 %v389, %v1354
        %v1356 = vpop.f32.mrf.mxu0
        %v1357 = vadd.f32 %v389, %v1356
        %1358 = vmatmul.bf16.gmra.mxu0 %v640
        %v1359 = vpop.f32.mrf.mxu0
        %v1360 = vadd.f32 %v389, %v1359
        %v1361 = vpop.f32.mrf.mxu0
        %v1362 = vadd.f32 %v389, %v1361
        %1363 = vmatmul.bf16.gmra.mxu0 %v642
        %v1364 = vpop.f32.mrf.mxu0
        %v1365 = vadd.f32 %v389, %v1364
        %v1366 = vpop.f32.mrf.mxu0
        %v1367 = vadd.f32 %v389, %v1366
        %1368 = vmatmul.bf16.gmra.mxu0 %v644
        %v1369 = vpop.f32.mrf.mxu0
        %v1370 = vadd.f32 %v389, %v1369
        %v1371 = vpop.f32.mrf.mxu0
        %v1372 = vadd.f32 %v389, %v1371
        %1373 = vmatmul.bf16.gmra.mxu0 %v646
        %v1374 = vpop.f32.mrf.mxu0
        %v1375 = vadd.f32 %v389, %v1374
        %v1376 = vpop.f32.mrf.mxu0
        %v1377 = vadd.f32 %v389, %v1376
        %1378 = vdwg.mxu0
        %1379 = vmatpush.bf16.msra.mxu0 %v839
        %1380 = vmatpush.bf16.msra.mxu0 %v837
        %1381 = vmatpush.bf16.msra.mxu0 %v835
        %1382 = vmatpush.bf16.msra.mxu0 %v833
        %1383 = vmatpush.bf16.msra.mxu0 %v831
        %1384 = vmatpush.bf16.msra.mxu0 %v829
        %1385 = vmatpush.bf16.msra.mxu0 %v827
        %1386 = vmatpush.bf16.msra.mxu0 %v825
        %1387 = vmatmul.bf16.gmra.mxu0 %v585
        %v1388 = vpop.f32.mrf.mxu0
        %v1389 = vadd.f32 %v1220, %v1388
        %v1390 = vpop.f32.mrf.mxu0
        %v1391 = vadd.f32 %v1222, %v1390
        %1392 = vmatmul.bf16.gmra.mxu0 %v587
        %v1393 = vpop.f32.mrf.mxu0
        %v1394 = vadd.f32 %v1225, %v1393
        %v1395 = vpop.f32.mrf.mxu0
        %v1396 = vadd.f32 %v1227, %v1395
        %1397 = vmatmul.bf16.gmra.mxu0 %v589
        %v1398 = vpop.f32.mrf.mxu0
        %v1399 = vadd.f32 %v1230, %v1398
        %v1400 = vpop.f32.mrf.mxu0
        %v1401 = vadd.f32 %v1232, %v1400
        %1402 = vmatmul.bf16.gmra.mxu0 %v591
        %v1403 = vpop.f32.mrf.mxu0
        %v1404 = vadd.f32 %v1235, %v1403
        %v1405 = vpop.f32.mrf.mxu0
        %v1406 = vadd.f32 %v1237, %v1405
        %1407 = vmatmul.bf16.gmra.mxu0 %v593
        %v1408 = vpop.f32.mrf.mxu0
        %v1409 = vadd.f32 %v1240, %v1408
        %v1410 = vpop.f32.mrf.mxu0
        %v1411 = vadd.f32 %v1242, %v1410
        %1412 = vmatmul.bf16.gmra.mxu0 %v595
        %v1413 = vpop.f32.mrf.mxu0
        %v1414 = vadd.f32 %v1245, %v1413
        %v1415 = vpop.f32.mrf.mxu0
        %v1416 = vadd.f32 %v1247, %v1415
        %1417 = vmatmul.bf16.gmra.mxu0 %v597
        %v1418 = vpop.f32.mrf.mxu0
        %v1419 = vadd.f32 %v1250, %v1418
        %v1420 = vpop.f32.mrf.mxu0
        %v1421 = vadd.f32 %v1252, %v1420
        %1422 = vmatmul.bf16.gmra.mxu0 %v599
        %v1423 = vpop.f32.mrf.mxu0
        %v1424 = vadd.f32 %v1255, %v1423
        %v1425 = vpop.f32.mrf.mxu0
        %v1426 = vadd.f32 %v1257, %v1425
        %1427 = vmatmul.bf16.gmra.mxu0 %v601
        %v1428 = vpop.f32.mrf.mxu0
        %v1429 = vadd.f32 %v1260, %v1428
        %v1430 = vpop.f32.mrf.mxu0
        %v1431 = vadd.f32 %v1262, %v1430
        %1432 = vmatmul.bf16.gmra.mxu0 %v603
        %v1433 = vpop.f32.mrf.mxu0
        %v1434 = vadd.f32 %v1265, %v1433
        %v1435 = vpop.f32.mrf.mxu0
        %v1436 = vadd.f32 %v1267, %v1435
        %1437 = vmatmul.bf16.gmra.mxu0 %v605
        %v1438 = vpop.f32.mrf.mxu0
        %v1439 = vadd.f32 %v1270, %v1438
        %v1440 = vpop.f32.mrf.mxu0
        %v1441 = vadd.f32 %v1272, %v1440
        %1442 = vmatmul.bf16.gmra.mxu0 %v607
        %v1443 = vpop.f32.mrf.mxu0
        %v1444 = vadd.f32 %v1275, %v1443
        %v1445 = vpop.f32.mrf.mxu0
        %v1446 = vadd.f32 %v1277, %v1445
        %1447 = vmatmul.bf16.gmra.mxu0 %v609
        %v1448 = vpop.f32.mrf.mxu0
        %v1449 = vadd.f32 %v1280, %v1448
        %v1450 = vpop.f32.mrf.mxu0
        %v1451 = vadd.f32 %v1282, %v1450
        %1452 = vmatmul.bf16.gmra.mxu0 %v611
        %v1453 = vpop.f32.mrf.mxu0
        %v1454 = vadd.f32 %v1285, %v1453
        %v1455 = vpop.f32.mrf.mxu0
        %v1456 = vadd.f32 %v1287, %v1455
        %1457 = vmatmul.bf16.gmra.mxu0 %v613
        %v1458 = vpop.f32.mrf.mxu0
        %v1459 = vadd.f32 %v1290, %v1458
        %v1460 = vpop.f32.mrf.mxu0
        %v1461 = vadd.f32 %v1292, %v1460
        %1462 = vmatmul.bf16.gmra.mxu0 %v615
        %v1463 = vpop.f32.mrf.mxu0
        %v1464 = vadd.f32 %v1295, %v1463
        %v1465 = vpop.f32.mrf.mxu0
        %v1466 = vadd.f32 %v1297, %v1465
        %1467 = vmatmul.bf16.gmra.mxu0 %v617
        %v1468 = vpop.f32.mrf.mxu0
        %v1469 = vadd.f32 %v1300, %v1468
        %v1470 = vpop.f32.mrf.mxu0
        %v1471 = vadd.f32 %v1302, %v1470
        %1472 = vmatmul.bf16.gmra.mxu0 %v619
        %v1473 = vpop.f32.mrf.mxu0
        %v1474 = vadd.f32 %v1305, %v1473
        %v1475 = vpop.f32.mrf.mxu0
        %v1476 = vadd.f32 %v1307, %v1475
        %1477 = vmatmul.bf16.gmra.mxu0 %v621
        %v1478 = vpop.f32.mrf.mxu0
        %v1479 = vadd.f32 %v1310, %v1478
        %v1480 = vpop.f32.mrf.mxu0
        %v1481 = vadd.f32 %v1312, %v1480
        %1482 = vmatmul.bf16.gmra.mxu0 %v623
        %v1483 = vpop.f32.mrf.mxu0
        %v1484 = vadd.f32 %v1315, %v1483
        %v1485 = vpop.f32.mrf.mxu0
        %v1486 = vadd.f32 %v1317, %v1485
        %1487 = vmatmul.bf16.gmra.mxu0 %v625
        %v1488 = vpop.f32.mrf.mxu0
        %v1489 = vadd.f32 %v1320, %v1488
        %v1490 = vpop.f32.mrf.mxu0
        %v1491 = vadd.f32 %v1322, %v1490
        %1492 = vmatmul.bf16.gmra.mxu0 %v627
        %v1493 = vpop.f32.mrf.mxu0
        %v1494 = vadd.f32 %v1325, %v1493
        %v1495 = vpop.f32.mrf.mxu0
        %v1496 = vadd.f32 %v1327, %v1495
        %1497 = vmatmul.bf16.gmra.mxu0 %v629
        %v1498 = vpop.f32.mrf.mxu0
        %v1499 = vadd.f32 %v1330, %v1498
        %v1500 = vpop.f32.mrf.mxu0
        %v1501 = vadd.f32 %v1332, %v1500
        %1502 = vmatmul.bf16.gmra.mxu0 %v631
        %v1503 = vpop.f32.mrf.mxu0
        %v1504 = vadd.f32 %v1335, %v1503
        %v1505 = vpop.f32.mrf.mxu0
        %v1506 = vadd.f32 %v1337, %v1505
        %1507 = vmatmul.bf16.gmra.mxu0 %v633
        %v1508 = vpop.f32.mrf.mxu0
        %v1509 = vadd.f32 %v1340, %v1508
        %v1510 = vpop.f32.mrf.mxu0
        %v1511 = vadd.f32 %v1342, %v1510
        %1512 = vmatmul.bf16.gmra.mxu0 %v635
        %v1513 = vpop.f32.mrf.mxu0
        %v1514 = vadd.f32 %v1345, %v1513
        %v1515 = vpop.f32.mrf.mxu0
        %v1516 = vadd.f32 %v1347, %v1515
        %1517 = vmatmul.bf16.gmra.mxu0 %v637
        %v1518 = vpop.f32.mrf.mxu0
        %v1519 = vadd.f32 %v1350, %v1518
        %v1520 = vpop.f32.mrf.mxu0
        %v1521 = vadd.f32 %v1352, %v1520
        %1522 = vmatmul.bf16.gmra.mxu0 %v639
        %v1523 = vpop.f32.mrf.mxu0
        %v1524 = vadd.f32 %v1355, %v1523
        %v1525 = vpop.f32.mrf.mxu0
        %v1526 = vadd.f32 %v1357, %v1525
        %1527 = vmatmul.bf16.gmra.mxu0 %v641
        %v1528 = vpop.f32.mrf.mxu0
        %v1529 = vadd.f32 %v1360, %v1528
        %v1530 = vpop.f32.mrf.mxu0
        %v1531 = vadd.f32 %v1362, %v1530
        %1532 = vmatmul.bf16.gmra.mxu0 %v643
        %v1533 = vpop.f32.mrf.mxu0
        %v1534 = vadd.f32 %v1365, %v1533
        %v1535 = vpop.f32.mrf.mxu0
        %v1536 = vadd.f32 %v1367, %v1535
        %1537 = vmatmul.bf16.gmra.mxu0 %v645
        %v1538 = vpop.f32.mrf.mxu0
        %v1539 = vadd.f32 %v1370, %v1538
        %v1540 = vpop.f32.mrf.mxu0
        %v1541 = vadd.f32 %v1372, %v1540
        %1542 = vmatmul.bf16.gmra.mxu0 %v647
        %v1543 = vpop.f32.mrf.mxu0
        %v1544 = vadd.f32 %v1375, %v1543
        %v1545 = vpop.f32.mrf.mxu0
        %v1546 = vadd.f32 %v1377, %v1545
        %1547 = vdwg.mxu0
        %v1548 = vpack.c.bf16 %v1389, %v1051
        %v1549 = vpack.c.bf16 %v1391, %v1053
        %v1550 = vpack.c.bf16 %v1394, %v1056
        %v1551 = vpack.c.bf16 %v1396, %v1058
        %v1552 = vpack.c.bf16 %v1399, %v1061
        %v1553 = vpack.c.bf16 %v1401, %v1063
        %v1554 = vpack.c.bf16 %v1404, %v1066
        %v1555 = vpack.c.bf16 %v1406, %v1068
        %v1556 = vpack.c.bf16 %v1409, %v1071
        %v1557 = vpack.c.bf16 %v1411, %v1073
        %v1558 = vpack.c.bf16 %v1414, %v1076
        %v1559 = vpack.c.bf16 %v1416, %v1078
        %v1560 = vpack.c.bf16 %v1419, %v1081
        %v1561 = vpack.c.bf16 %v1421, %v1083
        %v1562 = vpack.c.bf16 %v1424, %v1086
        %v1563 = vpack.c.bf16 %v1426, %v1088
        %v1564 = vpack.c.bf16 %v1429, %v1091
        %v1565 = vpack.c.bf16 %v1431, %v1093
        %v1566 = vpack.c.bf16 %v1434, %v1096
        %v1567 = vpack.c.bf16 %v1436, %v1098
        %v1568 = vpack.c.bf16 %v1439, %v1101
        %v1569 = vpack.c.bf16 %v1441, %v1103
        %v1570 = vpack.c.bf16 %v1444, %v1106
        %v1571 = vpack.c.bf16 %v1446, %v1108
        %v1572 = vpack.c.bf16 %v1449, %v1111
        %v1573 = vpack.c.bf16 %v1451, %v1113
        %v1574 = vpack.c.bf16 %v1454, %v1116
        %v1575 = vpack.c.bf16 %v1456, %v1118
        %v1576 = vpack.c.bf16 %v1459, %v1121
        %v1577 = vpack.c.bf16 %v1461, %v1123
        %v1578 = vpack.c.bf16 %v1464, %v1126
        %v1579 = vpack.c.bf16 %v1466, %v1128
        %v1580 = vpack.c.bf16 %v1469, %v1131
        %v1581 = vpack.c.bf16 %v1471, %v1133
        %v1582 = vpack.c.bf16 %v1474, %v1136
        %v1583 = vpack.c.bf16 %v1476, %v1138
        %v1584 = vpack.c.bf16 %v1479, %v1141
        %v1585 = vpack.c.bf16 %v1481, %v1143
        %v1586 = vpack.c.bf16 %v1484, %v1146
        %v1587 = vpack.c.bf16 %v1486, %v1148
        %v1588 = vpack.c.bf16 %v1489, %v1151
        %v1589 = vpack.c.bf16 %v1491, %v1153
        %v1590 = vpack.c.bf16 %v1494, %v1156
        %v1591 = vpack.c.bf16 %v1496, %v1158
        %v1592 = vpack.c.bf16 %v1499, %v1161
        %v1593 = vpack.c.bf16 %v1501, %v1163
        %v1594 = vpack.c.bf16 %v1504, %v1166
        %v1595 = vpack.c.bf16 %v1506, %v1168
        %v1596 = vpack.c.bf16 %v1509, %v1171
        %v1597 = vpack.c.bf16 %v1511, %v1173
        %v1598 = vpack.c.bf16 %v1514, %v1176
        %v1599 = vpack.c.bf16 %v1516, %v1178
        %v1600 = vpack.c.bf16 %v1519, %v1181
        %v1601 = vpack.c.bf16 %v1521, %v1183
        %v1602 = vpack.c.bf16 %v1524, %v1186
        %v1603 = vpack.c.bf16 %v1526, %v1188
        %v1604 = vpack.c.bf16 %v1529, %v1191
        %v1605 = vpack.c.bf16 %v1531, %v1193
        %v1606 = vpack.c.bf16 %v1534, %v1196
        %v1607 = vpack.c.bf16 %v1536, %v1198
        %v1608 = vpack.c.bf16 %v1539, %v1201
        %v1609 = vpack.c.bf16 %v1541, %v1203
        %v1610 = vpack.c.bf16 %v1544, %v1206
        %v1611 = vpack.c.bf16 %v1546, %v1208
        %1612 = vst [vmem:[%s282] sm:$0xff] %v1548
        %1613 = vst [vmem:[%s282 + $0x8] sm:$0xff] %v1549
        %1614 = vst [vmem:[%s282 + $0x10] sm:$0xff] %v1550
        %1615 = vst [vmem:[%s282 + $0x18] sm:$0xff] %v1551
        %1616 = vst [vmem:[%s282 + $0x20] sm:$0xff] %v1552
        %1617 = vst [vmem:[%s282 + $0x28] sm:$0xff] %v1553
        %1618 = vst [vmem:[%s282 + $0x30] sm:$0xff] %v1554
        %1619 = vst [vmem:[%s282 + $0x38] sm:$0xff] %v1555
        %1620 = vst [vmem:[%s282 + $0x40] sm:$0xff] %v1556
        %1621 = vst [vmem:[%s282 + $0x48] sm:$0xff] %v1557
        %1622 = vst [vmem:[%s282 + $0x50] sm:$0xff] %v1558
        %1623 = vst [vmem:[%s282 + $0x58] sm:$0xff] %v1559
        %1624 = vst [vmem:[%s282 + $0x60] sm:$0xff] %v1560
        %1625 = vst [vmem:[%s282 + $0x68] sm:$0xff] %v1561
        %1626 = vst [vmem:[%s282 + $0x70] sm:$0xff] %v1562
        %1627 = vst [vmem:[%s282 + $0x78] sm:$0xff] %v1563
        %1628 = vst [vmem:[%s282 + $0x80] sm:$0xff] %v1564
        %1629 = vst [vmem:[%s282 + $0x88] sm:$0xff] %v1565
        %1630 = vst [vmem:[%s282 + $0x90] sm:$0xff] %v1566
        %1631 = vst [vmem:[%s282 + $0x98] sm:$0xff] %v1567
        %1632 = vst [vmem:[%s282 + $0xa0] sm:$0xff] %v1568
        %1633 = vst [vmem:[%s282 + $0xa8] sm:$0xff] %v1569
        %1634 = vst [vmem:[%s282 + $0xb0] sm:$0xff] %v1570
        %1635 = vst [vmem:[%s282 + $0xb8] sm:$0xff] %v1571
        %1636 = vst [vmem:[%s282 + $0xc0] sm:$0xff] %v1572
        %1637 = vst [vmem:[%s282 + $0xc8] sm:$0xff] %v1573
        %1638 = vst [vmem:[%s282 + $0xd0] sm:$0xff] %v1574
        %1639 = vst [vmem:[%s282 + $0xd8] sm:$0xff] %v1575
        %1640 = vst [vmem:[%s282 + $0xe0] sm:$0xff] %v1576
        %1641 = vst [vmem:[%s282 + $0xe8] sm:$0xff] %v1577
        %1642 = vst [vmem:[%s282 + $0xf0] sm:$0xff] %v1578
        %1643 = vst [vmem:[%s282 + $0xf8] sm:$0xff] %v1579
        %1644 = vst [vmem:[%s282 + $0x100] sm:$0xff] %v1580
        %1645 = vst [vmem:[%s282 + $0x108] sm:$0xff] %v1581
        %1646 = vst [vmem:[%s282 + $0x110] sm:$0xff] %v1582
        %1647 = vst [vmem:[%s282 + $0x118] sm:$0xff] %v1583
        %1648 = vst [vmem:[%s282 + $0x120] sm:$0xff] %v1584
        %1649 = vst [vmem:[%s282 + $0x128] sm:$0xff] %v1585
        %1650 = vst [vmem:[%s282 + $0x130] sm:$0xff] %v1586
        %1651 = vst [vmem:[%s282 + $0x138] sm:$0xff] %v1587
        %1652 = vst [vmem:[%s282 + $0x140] sm:$0xff] %v1588
        %1653 = vst [vmem:[%s282 + $0x148] sm:$0xff] %v1589
        %1654 = vst [vmem:[%s282 + $0x150] sm:$0xff] %v1590
        %1655 = vst [vmem:[%s282 + $0x158] sm:$0xff] %v1591
        %1656 = vst [vmem:[%s282 + $0x160] sm:$0xff] %v1592
        %1657 = vst [vmem:[%s282 + $0x168] sm:$0xff] %v1593
        %1658 = vst [vmem:[%s282 + $0x170] sm:$0xff] %v1594
        %1659 = vst [vmem:[%s282 + $0x178] sm:$0xff] %v1595
        %1660 = vst [vmem:[%s282 + $0x180] sm:$0xff] %v1596
        %1661 = vst [vmem:[%s282 + $0x188] sm:$0xff] %v1597
        %1662 = vst [vmem:[%s282 + $0x190] sm:$0xff] %v1598
        %1663 = vst [vmem:[%s282 + $0x198] sm:$0xff] %v1599
        %1664 = vst [vmem:[%s282 + $0x1a0] sm:$0xff] %v1600
        %1665 = vst [vmem:[%s282 + $0x1a8] sm:$0xff] %v1601
        %1666 = vst [vmem:[%s282 + $0x1b0] sm:$0xff] %v1602
        %1667 = vst [vmem:[%s282 + $0x1b8] sm:$0xff] %v1603
        %1668 = vst [vmem:[%s282 + $0x1c0] sm:$0xff] %v1604
        %1669 = vst [vmem:[%s282 + $0x1c8] sm:$0xff] %v1605
        %1670 = vst [vmem:[%s282 + $0x1d0] sm:$0xff] %v1606
        %1671 = vst [vmem:[%s282 + $0x1d8] sm:$0xff] %v1607
        %1672 = vst [vmem:[%s282 + $0x1e0] sm:$0xff] %v1608
        %1673 = vst [vmem:[%s282 + $0x1e8] sm:$0xff] %v1609
        %1674 = vst [vmem:[%s282 + $0x1f0] sm:$0xff] %v1610
        %1675 = vst [vmem:[%s282 + $0x1f8] sm:$0xff] %v1611
        %s1676 = sand.u32 %s132, 1
        %s1677 = scalar_lea.sflag [#allocation4], %s1676
        %s1678 = sand.u32 %s132, 1
        %s1679 = smul.addr %s1678, 512
        %s1680 = scalar_lea.vmem [#allocation8], %s1679
        // Predicated region
        $region45: #{tpu_custom_call.1} parent=31 // pred_check
          %p1681 = pneg %p142
        $region46: #{tpu_custom_call.1} parent=31 // pred_check_branch
          %1683 = sbr.rel (%p1681) target = $region48
        $region47: #{tpu_custom_call.1} parent=31 // pred_region
          %s1684 = smul.u32 64, %s26
          %s1685 = smul.u32 2, %s27
          %1687 = vsyncadd %s1677, 0
          %s1688 = smul.addr %s1684, 6
          %s1689 = sadd.s32 %s1685, %s1688
          %s1690 = smul.addr %s1689, 4
          %s1691 = scalar_lea.hbm %s3, %s1690
          %s1692 = sshll.u32 %s1680, 4
          %s1693 = int_to_ptr.vmem [resolvable:$true] %s1692
          %s1694 = sshll.u32 %s1691, 4
          %s1695 = int_to_ptr.hbm [resolvable:$true] %s1694
          %1700 = dma.vmem_to_hbm [thread:$0]  %s1693, 8192, %s1695, %s1677, 128, 384, 8
        $region48: #{tpu_custom_call.1} parent=31 // pred_fallthru
          _
      $region32: #{tpu_custom_call.1} parent=5 // pred_fallthru
        _
      %p1701 = scmp.le.s32.totalorder 2, %s16
      // Predicated region
      $region49: #{tpu_custom_call.1} parent=5 // pred_check
        %p1702 = pneg %p1701
      $region50: #{tpu_custom_call.1} parent=5 // pred_check_branch
        %1704 = sbr.rel (%p1702) target = $region52
      $region51: #{tpu_custom_call.1} parent=5 // pred_region
        %s1705 = ssub.s32 %s16, 2
        // Predicated region
        $region53: #{tpu_custom_call.1} parent=51 // pred_check
          %p1706 = pneg %p148
        $region54: #{tpu_custom_call.1} parent=51 // pred_check_branch
          %1708 = sbr.rel (%p1706) target = $region56
        $region55: #{tpu_custom_call.1} parent=51 // pred_region
          %s1709 = sand.u32 %s133, 1
          %s1710 = scalar_lea.sflag [#allocation4], %s1709
          %s1711 = sand.u32 %s133, 1
          %s1712 = smul.addr %s1711, 512
          %s1713 = scalar_lea.vmem [#allocation8], %s1712
          %1715 = dma.done %s1710, 8192
        $region56: #{tpu_custom_call.1} parent=51 // pred_fallthru
          _
      $region52: #{tpu_custom_call.1} parent=5 // pred_fallthru
        _
    $region6: #{tpu_custom_call.1} parent=1 // loop_footer
      %s20 = sadd.s32 1, %s16
    $region7: #{tpu_custom_call.1} parent=1 // loop_footer_branch
      %15 = sbr.rel target = $region3
    $region8: #{tpu_custom_call.1} parent=1 // loop_exit
      _
    %1716 = vsyncpa [#allocation3], 1
    %s1717 = scalar_lea.sflag [#allocation3], 1
    %1718 = vsyncpa %s1717, 1
    %1719 = vsyncpa [#allocation6], 1
    %s1720 = scalar_lea.sflag [#allocation6], 1
    %1721 = vsyncpa %s1720, 1
    %1722 = vsyncpa [#allocation4], 1
    %s1723 = scalar_lea.sflag [#allocation4], 1
    %1724 = vsyncpa %s1723, 1

</llo_original>
